<compile_context>
chip_gen: v7x
topology: tpu7x:2x2x1
jax: 0.10.0
libtpu: 0.0.40
codegen_flags: <defaults>
</compile_context>

<pallas_src>
import numpy as np
import jax
import jax.numpy as jnp
from jax.experimental import pallas as pl
from jax.experimental.pallas import tpu as pltpu


# ----------------------------------------------------------------------------- helpers
def _softmax_lastdim(a):
    m = jnp.max(a, axis=-1, keepdims=True)
    e = jnp.exp(a - m)
    # exact reciprocal: keeps the 1e-4 tolerances safe.
    return e * pl.reciprocal(jnp.sum(e, axis=-1, keepdims=True), approx=False)


def _pick_time_block(t, n, target_rows=512):
    """Time-block size TB.

    Targets ~target_rows (= TB*N) rows per grid step (amortize the ~0.35us/step
    pipeline overhead), keeps ceil(T/TB) >= 2 when T > 1 (v7x megacore), prefers
    divisors of T (no padding) but falls back to padding for awkward/prime T.
    """
    if t <= 1:
        return 1
    cap = max(1, min(t // 2, max(1, target_rows // max(n, 1))))
    best_div = 1
    for tb in range(cap, 0, -1):
        if t % tb == 0:
            best_div = tb
            break
    if best_div * 2 > cap:   # divisor is close enough to the cap: no padding needed
        return best_div
    return cap               # pad T up to a multiple of cap instead of TB=1


def _compiler_params(tb, n, d, h, has_w, has_m):
    """dimension_semantics + a VMEM limit derived from the real block working set."""
    full = has_w or has_m
    blk_in = tb * n * d * 4
    blk_out = tb * n * h * d * 4 * (2 if full else 1)
    blk_att = tb * h * n * n * ((4 if has_w else 0) + (1 if has_m else 0))
    weights = 3 * (d * h * d + h * d) * 4
    raw = n * n * 4
    est = weights + 2 * (blk_in + blk_out + blk_att + raw)   # double-buffered streams
    est = int(3 * est)                                       # q/k/v/att temps + headroom
    kwargs = dict(dimension_semantics=("parallel",))
    if est > 16 * 1024 * 1024:                               # above v5e's scoped default
        # cap at 64 MiB: v7x has only 64 MiB physical VMEM per TensorCore.
        kwargs["vmem_limit_bytes"] = int(min(est, 64 * 1024 * 1024))
    return pltpu.CompilerParams(**kwargs)


def _to_torch_layout(y, n, t, h, d):
    # y: (T, N, H*D) with y[t, n, h*D + d] == matmul_result[t, h, n, d].
    # torch: result.permute(1, 2, 0, 3).contiguous().view(N, T, heads*D)
    return jnp.transpose(y.reshape(t, n, h, d), (2, 1, 0, 3)).reshape(n, t, h * d)


# ----------------------------------------------------------------------------- kernel
def _make_kernel(dim, heads, tb, n, raw_row, has_w, has_m):
    """One grid step == TB time steps; attention is over the N (node) axis."""
    full = has_w or has_m

    def kernel(*refs):
        x_ref, wq_ref, wk_ref, wv_ref, bq_ref, bk_ref, bv_ref = refs[:7]
        pos = 7
        attw_ref = attm_ref = None
        if has_w:
            attw_ref = refs[pos]; pos += 1
        if has_m:
            attm_ref = refs[pos]; pos += 1
        if full:
            out_ref, out_raw_ref, raw_ref = refs[pos], refs[pos + 1], refs[pos + 2]
        else:
            out_raw_ref, raw_ref = refs[pos], refs[pos + 1]
            out_ref = None

        # Fused all-head projections: one (TB*N, D) @ (D, H*D) MXU matmul each.
        x2 = x_ref[...].reshape(tb * n, dim)
        q = jnp.dot(x2, wq_ref[...], preferred_element_type=jnp.float32) + bq_ref[...]
        k = jnp.dot(x2, wk_ref[...], preferred_element_type=jnp.float32) + bk_ref[...]
        v = jnp.dot(x2, wv_ref[...], preferred_element_type=jnp.float32) + bv_ref[...]
        q3 = q.reshape(tb, n, heads * dim)
        k3 = k.reshape(tb, n, heads * dim)
        v3 = v.reshape(tb, n, heads * dim)

        attw = attw_ref[...] if has_w else None          # (TB, H, N, N) f32
        attm = attm_ref[...] if has_m else None          # (TB, H, N, N) int8

        scale = np.float32(1.0 / np.sqrt(dim))
        neg = np.float32(-1e30)   # finite "-inf": no NaN on fully-masked rows

        # Static unroll over heads; each head reads a 32-lane slice of the fused
        # projection and stores straight into its lane slice of the output block
        # (no trailing concatenate).
        for h in range(heads):
            sl = slice(h * dim, (h + 1) * dim)
            qh, kh, vh = q3[:, :, sl], k3[:, :, sl], v3[:, :, sl]
            att = jnp.einsum('tnd,tmd->tnm', qh, kh,
                             preferred_element_type=jnp.float32) * scale   # (TB,N,N)
            p_raw = _softmax_lastdim(att)
            out_raw_ref[:, :, sl] = jnp.einsum('tnm,tmd->tnd', p_raw, vh,
                                               preferred_element_type=jnp.float32)
            if h == 0:
                # Only one row per block is ever consumed (the real last time step
                # lives at static in-block row `raw_row` of its block).
                raw_ref[...] = p_raw[raw_row:raw_row + 1]
            if full:
                att2 = att
                if has_w:
                    att2 = att2 * attw[:, h]
                if has_m:
                    att2 = jnp.where(attm[:, h] != 0, neg, att2)
                p = _softmax_lastdim(att2)
                out_ref[:, :, sl] = jnp.einsum('tnm,tmd->tnd', p, vh,
                                               preferred_element_type=jnp.float32)

    return kernel


# ----------------------------------------------------------------------------- wrapper
def spatial_attention(x, wq, wk, wv, bq, bk, bv, heads,
                      attention_mask=None, attention_weights=None):
    """Pallas implementation of SpatialAttention.forward.

    x: (N, T, D) float32, weights: (heads*D, D), biases: (heads*D,).
    Returns (out, out_raw, raw_att[-1, 0]) exactly like the PyTorch module.
    """
    N, T, D = x.shape
    H = heads
    has_w = attention_weights is not None
    has_m = attention_mask is not None
    full = has_w or has_m

    TB = _pick_time_block(T, N)
    GT = -(-T // TB)                 # cdiv
    T_pad = GT * TB
    raw_row = (T - 1) % TB           # in-block row of the real last time step
    raw_blk = (T - 1) // TB          # block that holds it

    # (T, N, D): attention mixes all N nodes per time step, so T is the blocked axis.
    x_t = jnp.transpose(jnp.asarray(x, jnp.float32), (1, 0, 2))
    if T_pad != T:
        x_t = jnp.pad(x_t, ((0, T_pad - T), (0, 0), (0, 0)))   # zero time steps: benign

    # Pre-transposed fused weights (once in the wrapper, resident in VMEM thereafter).
    wq_f = jnp.asarray(wq, jnp.float32).T            # (D, H*D)
    wk_f = jnp.asarray(wk, jnp.float32).T
    wv_f = jnp.asarray(wv, jnp.float32).T
    bq_f = jnp.asarray(bq, jnp.float32).reshape(1, H * D)
    bk_f = jnp.asarray(bk, jnp.float32).reshape(1, H * D)
    bv_f = jnp.asarray(bv, jnp.float32).reshape(1, H * D)

    x_spec = pl.BlockSpec((TB, N, D), lambda i: (i, 0, 0))
    w_spec = pl.BlockSpec((D, H * D), lambda i: (0, 0))          # resident
    b_spec = pl.BlockSpec((1, H * D), lambda i: (0, 0))          # resident
    o_spec = pl.BlockSpec((TB, N, H * D), lambda i: (i, 0, 0))
    r_spec = pl.BlockSpec((1, N, N), lambda i: (i, 0, 0))
    a_spec = pl.BlockSpec((TB, H, N, N), lambda i: (i, 0, 0, 0))

    inputs = [x_t, wq_f, wk_f, wv_f, bq_f, bk_f, bv_f]
    in_specs = [x_spec, w_spec, w_spec, w_spec, b_spec, b_spec, b_spec]

    if has_w:
        attw = jnp.broadcast_to(jnp.asarray(attention_weights, jnp.float32),
                                (T, H, N, N))
        if T_pad != T:
            attw = jnp.pad(attw, ((0, T_pad - T), (0, 0), (0, 0), (0, 0)))
        inputs.append(attw); in_specs.append(a_spec)
    if has_m:
        attm = jnp.broadcast_to(jnp.asarray(attention_mask),
                                (T, H, N, N)).astype(jnp.int8)     # 4x less DMA than f32
        if T_pad != T:
            attm = jnp.pad(attm, ((0, T_pad - T), (0, 0), (0, 0), (0, 0)))
        inputs.append(attm); in_specs.append(a_spec)

    if full:
        out_specs = [o_spec, o_spec, r_spec]
        out_shape = [jax.ShapeDtypeStruct((T_pad, N, H * D), jnp.float32),
                     jax.ShapeDtypeStruct((T_pad, N, H * D), jnp.float32),
                     jax.ShapeDtypeStruct((GT, N, N), jnp.float32)]
    else:
        out_specs = [o_spec, r_spec]
        out_shape = [jax.ShapeDtypeStruct((T_pad, N, H * D), jnp.float32),
                     jax.ShapeDtypeStruct((GT, N, N), jnp.float32)]

    kernel = _make_kernel(D, H, TB, N, raw_row, has_w, has_m)
    results = pl.pallas_call(
        kernel,
        grid=(GT,),
        in_specs=in_specs,
        out_specs=out_specs,
        out_shape=out_shape,
        compiler_params=_compiler_params(TB, N, D, H, has_w, has_m),
    )(*inputs)

    if full:
        out_tn, out_raw_tn, raw_all = results
        out = _to_torch_layout(out_tn[:T], N, T, H, D)
        out_raw = _to_torch_layout(out_raw_tn[:T], N, T, H, D)
        return out, out_raw, raw_all[raw_blk]
    else:
        out_raw_tn, raw_all = results
        out_raw = _to_torch_layout(out_raw_tn[:T], N, T, H, D)
        # With no mask/weights the module's `out` is numerically identical to out_raw.
        return out_raw, out_raw, raw_all[raw_blk]


# ----------------------------------------------------------------------------- reference
def spatial_attention_ref(x, wq, wk, wv, bq, bk, bv, heads,
                          attention_mask=None, attention_weights=None):
    """Pure-JAX reference mirroring the PyTorch forward."""
    N, T, D = x.shape
    H = heads
    q = (x @ wq.T + bq).reshape(N, T, H, D).transpose(1, 2, 0, 3)   # (T,H,N,D)
    k = (x @ wk.T + bk).reshape(N, T, H, D).transpose(1, 2, 3, 0)   # (T,H,D,N)
    v = (x @ wv.T + bv).reshape(N, T, H, D).transpose(1, 2, 0, 3)   # (T,H,N,D)
    att = jnp.matmul(q, k) / np.sqrt(D)
    raw_att = jax.nn.softmax(att, axis=-1)
    out_raw = jnp.matmul(raw_att, v).transpose(1, 2, 0, 3).reshape(N, T, H * D)
    att2 = att
    if attention_weights is not None:
        att2 = att2 * attention_weights
    if attention_mask is not None:
        att2 = jnp.where(attention_mask, -jnp.inf, att2)
    att2 = jax.nn.softmax(att2, axis=-1)
    out = jnp.matmul(att2, v).transpose(1, 2, 0, 3).reshape(N, T, H * D)
    return out, out_raw, raw_att[-1, 0, :, :]


# ----------------------------------------------------------------------------- test
if __name__ == "__main__":
    # Small shapes consistent with the module: x is (N, T, D).
    N, T, D, HEADS = 8, 8, 32, 2

    key = jax.random.PRNGKey(0)
    kx, kq, kk, kv, kb1, kb2, kb3, kw, km, kx2 = jax.random.split(key, 10)
    x = jax.random.normal(kx, (N, T, D), dtype=jnp.float32)

    # Deterministic random parameters (stronger check than the eye_ init).
    wq = 0.2 * jax.random.normal(kq, (HEADS * D, D), dtype=jnp.float32)
    wk = 0.2 * jax.random.normal(kk, (HEADS * D, D), dtype=jnp.float32)
    wv = 0.2 * jax.random.normal(kv, (HEADS * D, D), dtype=jnp.float32)
    bq = 0.1 * jax.random.normal(kb1, (HEADS * D,), dtype=jnp.float32)
    bk = 0.1 * jax.random.normal(kb2, (HEADS * D,), dtype=jnp.float32)
    bv = 0.1 * jax.random.normal(kb3, (HEADS * D,), dtype=jnp.float32)

    def check(got, want):
        for g, w in zip(got, want):
            np.testing.assert_allclose(np.asarray(g), np.asarray(w),
                                       rtol=1e-4, atol=1e-4)

    # --- default path (no mask / no weights) ---
    res = jax.block_until_ready(spatial_attention(x, wq, wk, wv, bq, bk, bv, HEADS))
    ref = spatial_attention_ref(x, wq, wk, wv, bq, bk, bv, HEADS)
    check(res, ref)
    assert res[0].shape == (N, T, HEADS * D)
    assert res[1].shape == (N, T, HEADS * D)
    assert res[2].shape == (N, N)

    # --- padded / prime-T default path (exercises non-divisor TB + padding) ---
    T2 = 7
    x7 = jax.random.normal(kx2, (N, T2, D), dtype=jnp.float32)
    res = jax.block_until_ready(spatial_attention(x7, wq, wk, wv, bq, bk, bv, HEADS))
    ref = spatial_attention_ref(x7, wq, wk, wv, bq, bk, bv, HEADS)
    check(res, ref)

    # --- masked + weighted path (no fully-masked rows, so -1e30 == -inf semantics) ---
    attw = 0.5 + jax.random.uniform(kw, (T, HEADS, N, N), dtype=jnp.float32)
    mask = jax.random.uniform(km, (T, HEADS, N, N)) < 0.2
    mask = jnp.logical_and(mask, ~jnp.eye(N, dtype=bool))
    res = jax.block_until_ready(spatial_attention(
        x, wq, wk, wv, bq, bk, bv, HEADS,
        attention_mask=mask, attention_weights=attw))
    ref = spatial_attention_ref(x, wq, wk, wv, bq, bk, bv, HEADS,
                                attention_mask=mask, attention_weights=attw)
    check(res, ref)

    # --- weights-only path ---
    res = jax.block_until_ready(spatial_attention(
        x, wq, wk, wv, bq, bk, bv, HEADS, attention_weights=attw))
    ref = spatial_attention_ref(x, wq, wk, wv, bq, bk, bv, HEADS,
                                attention_weights=attw)
    check(res, ref)

    # --- mask-only path ---
    res = jax.block_until_ready(spatial_attention(
        x, wq, wk, wv, bq, bk, bv, HEADS, attention_mask=mask))
    ref = spatial_attention_ref(x, wq, wk, wv, bq, bk, bv, HEADS,
                                attention_mask=mask)
    check(res, ref)

    print("KERNEL_OK")
</pallas_src>

<mosaic_0001>
module attributes {stable_mosaic.version = 11 : i64} {
  func.func @kernel(%arg0: i32, %arg1: memref<4x8x32xf32, #tpu.memory_space<vmem>>, %arg2: memref<32x64xf32, #tpu.memory_space<vmem>>, %arg3: memref<32x64xf32, #tpu.memory_space<vmem>>, %arg4: memref<32x64xf32, #tpu.memory_space<vmem>>, %arg5: memref<1x64xf32, #tpu.memory_space<vmem>>, %arg6: memref<1x64xf32, #tpu.memory_space<vmem>>, %arg7: memref<1x64xf32, #tpu.memory_space<vmem>>, %arg8: memref<4x8x64xf32, #tpu.memory_space<vmem>>, %arg9: memref<1x8x8xf32, #tpu.memory_space<vmem>>) attributes {dimension_semantics = [#tpu.dimension_semantics<parallel>], iteration_bounds = array<i64: 2>, scalar_prefetch = 0 : i64, scratch_operands = 0 : i64, tpu.core_type = #tpu.core_type<tc>, window_params = [{transform_indices = @transform_0, window_bounds = array<i64: 4, 8, 32>}, {pipeline_mode = #tpu.pipeline_mode<synchronous>, transform_indices = @transform_1, window_bounds = array<i64: 32, 64>}, {pipeline_mode = #tpu.pipeline_mode<synchronous>, transform_indices = @transform_2, window_bounds = array<i64: 32, 64>}, {pipeline_mode = #tpu.pipeline_mode<synchronous>, transform_indices = @transform_3, window_bounds = array<i64: 32, 64>}, {pipeline_mode = #tpu.pipeline_mode<synchronous>, transform_indices = @transform_4, window_bounds = array<i64: 1, 64>}, {pipeline_mode = #tpu.pipeline_mode<synchronous>, transform_indices = @transform_5, window_bounds = array<i64: 1, 64>}, {pipeline_mode = #tpu.pipeline_mode<synchronous>, transform_indices = @transform_6, window_bounds = array<i64: 1, 64>}, {transform_indices = @transform_7, window_bounds = array<i64: 4, 8, 64>}, {transform_indices = @transform_8, window_bounds = array<i64: 1, 8, 8>}]} {
    %c0 = arith.constant 0 : index
    %c0_0 = arith.constant 0 : index
    %c0_1 = arith.constant 0 : index
    %0 = vector.load %arg1[%c0, %c0_0, %c0_1] : memref<4x8x32xf32, #tpu.memory_space<vmem>>, vector<4x8x32xf32>
    %1 = vector.shape_cast %0 : vector<4x8x32xf32> to vector<32x32xf32>
    %c0_2 = arith.constant 0 : index
    %c0_3 = arith.constant 0 : index
    %2 = vector.load %arg2[%c0_2, %c0_3] : memref<32x64xf32, #tpu.memory_space<vmem>>, vector<32x64xf32>
    %cst = arith.constant dense<0.000000e+00> : vector<32x64xf32>
    %3 = tpu.matmul %1, %2, %cst {dimension_numbers = #tpu.dot_dimension_numbers<[1], [0], [0], [1], [0, 0, 1, 1], [], []>} : vector<32x32xf32>, vector<32x64xf32>, vector<32x64xf32> -> vector<32x64xf32>
    %c0_4 = arith.constant 0 : index
    %c0_5 = arith.constant 0 : index
    %4 = vector.load %arg5[%c0_4, %c0_5] : memref<1x64xf32, #tpu.memory_space<vmem>>, vector<1x64xf32>
    %5 = vector.broadcast %4 : vector<1x64xf32> to vector<32x64xf32>
    %6 = arith.addf %3, %5 : vector<32x64xf32>
    %c0_6 = arith.constant 0 : index
    %c0_7 = arith.constant 0 : index
    %7 = vector.load %arg3[%c0_6, %c0_7] : memref<32x64xf32, #tpu.memory_space<vmem>>, vector<32x64xf32>
    %cst_8 = arith.constant dense<0.000000e+00> : vector<32x64xf32>
    %8 = tpu.matmul %1, %7, %cst_8 {dimension_numbers = #tpu.dot_dimension_numbers<[1], [0], [0], [1], [0, 0, 1, 1], [], []>} : vector<32x32xf32>, vector<32x64xf32>, vector<32x64xf32> -> vector<32x64xf32>
    %c0_9 = arith.constant 0 : index
    %c0_10 = arith.constant 0 : index
    %9 = vector.load %arg6[%c0_9, %c0_10] : memref<1x64xf32, #tpu.memory_space<vmem>>, vector<1x64xf32>
    %10 = vector.broadcast %9 : vector<1x64xf32> to vector<32x64xf32>
    %11 = arith.addf %8, %10 : vector<32x64xf32>
    %c0_11 = arith.constant 0 : index
    %c0_12 = arith.constant 0 : index
    %12 = vector.load %arg4[%c0_11, %c0_12] : memref<32x64xf32, #tpu.memory_space<vmem>>, vector<32x64xf32>
    %cst_13 = arith.constant dense<0.000000e+00> : vector<32x64xf32>
    %13 = tpu.matmul %1, %12, %cst_13 {dimension_numbers = #tpu.dot_dimension_numbers<[1], [0], [0], [1], [0, 0, 1, 1], [], []>} : vector<32x32xf32>, vector<32x64xf32>, vector<32x64xf32> -> vector<32x64xf32>
    %c0_14 = arith.constant 0 : index
    %c0_15 = arith.constant 0 : index
    %14 = vector.load %arg7[%c0_14, %c0_15] : memref<1x64xf32, #tpu.memory_space<vmem>>, vector<1x64xf32>
    %15 = vector.broadcast %14 : vector<1x64xf32> to vector<32x64xf32>
    %16 = arith.addf %13, %15 : vector<32x64xf32>
    %17 = vector.shape_cast %6 : vector<32x64xf32> to vector<4x8x64xf32>
    %18 = vector.shape_cast %11 : vector<32x64xf32> to vector<4x8x64xf32>
    %19 = vector.shape_cast %16 : vector<32x64xf32> to vector<4x8x64xf32>
    %20 = vector.extract_strided_slice %17 {offsets = [0, 0, 0], sizes = [4, 8, 32], strides = [1, 1, 1]} : vector<4x8x64xf32> to vector<4x8x32xf32>
    %21 = vector.extract_strided_slice %18 {offsets = [0, 0, 0], sizes = [4, 8, 32], strides = [1, 1, 1]} : vector<4x8x64xf32> to vector<4x8x32xf32>
    %22 = vector.extract_strided_slice %19 {offsets = [0, 0, 0], sizes = [4, 8, 32], strides = [1, 1, 1]} : vector<4x8x64xf32> to vector<4x8x32xf32>
    "tpu.trace_start"() <{level = 10 : i32, message = "tnd,tmd->tnm"}> : () -> ()
    %cst_16 = arith.constant dense<0.000000e+00> : vector<4x8x8xf32>
    %23 = tpu.matmul %20, %21, %cst_16 {dimension_numbers = #tpu.dot_dimension_numbers<[2], [2], [1], [1], [0, 0, 0, 1, 1, 1], [0], [0]>} : vector<4x8x32xf32>, vector<4x8x32xf32>, vector<4x8x8xf32> -> vector<4x8x8xf32>
    "tpu.trace_stop"() : () -> ()
    %cst_17 = arith.constant 0.176776692 : f32
    %24 = vector.broadcast %cst_17 : f32 to vector<4x8x8xf32>
    %25 = arith.mulf %23, %24 : vector<4x8x8xf32>
    %cst_18 = arith.constant dense<0xFF800000> : vector<4x8xf32>
    %26 = vector.multi_reduction <maximumf>, %25, %cst_18 [2] : vector<4x8x8xf32> to vector<4x8xf32>
    %27 = vector.shape_cast %26 : vector<4x8xf32> to vector<4x8x1xf32>
    %28 = vector.broadcast %27 : vector<4x8x1xf32> to vector<4x8x8xf32>
    %29 = arith.subf %25, %28 : vector<4x8x8xf32>
    %30 = math.exp %29 : vector<4x8x8xf32>
    %cst_19 = arith.constant dense<0.000000e+00> : vector<4x8xf32>
    %31 = vector.multi_reduction <add>, %30, %cst_19 [2] : vector<4x8x8xf32> to vector<4x8xf32>
    %32 = vector.shape_cast %31 : vector<4x8xf32> to vector<4x8x1xf32>
    %33 = tpu.reciprocal %32 : vector<4x8x1xf32> -> vector<4x8x1xf32>
    %34 = vector.broadcast %33 : vector<4x8x1xf32> to vector<4x8x8xf32>
    %35 = arith.mulf %30, %34 : vector<4x8x8xf32>
    "tpu.trace_start"() <{level = 10 : i32, message = "tnm,tmd->tnd"}> : () -> ()
    %cst_20 = arith.constant dense<0.000000e+00> : vector<4x8x32xf32>
    %36 = tpu.matmul %35, %22, %cst_20 {dimension_numbers = #tpu.dot_dimension_numbers<[2], [1], [1], [2], [0, 0, 0, 1, 1, 2], [0], [0]>} : vector<4x8x8xf32>, vector<4x8x32xf32>, vector<4x8x32xf32> -> vector<4x8x32xf32>
    "tpu.trace_stop"() : () -> ()
    %c0_21 = arith.constant 0 : index
    %c0_22 = arith.constant 0 : index
    %c0_23 = arith.constant 0 : index
    %37 = vector.load %arg8[%c0_21, %c0_22, %c0_23] : memref<4x8x64xf32, #tpu.memory_space<vmem>>, vector<4x8x32xf32>
    tpu.vector_store %arg8[%c0_21, %c0_22, %c0_23], %36 {strides = array<i32>} : memref<4x8x64xf32, #tpu.memory_space<vmem>>, vector<4x8x32xf32>,
    %38 = vector.extract_strided_slice %35 {offsets = [3, 0, 0], sizes = [1, 8, 8], strides = [1, 1, 1]} : vector<4x8x8xf32> to vector<1x8x8xf32>
    %c0_24 = arith.constant 0 : index
    %c0_25 = arith.constant 0 : index
    %c0_26 = arith.constant 0 : index
    %39 = vector.load %arg9[%c0_24, %c0_25, %c0_26] : memref<1x8x8xf32, #tpu.memory_space<vmem>>, vector<1x8x8xf32>
    tpu.vector_store %arg9[%c0_24, %c0_25, %c0_26], %38 {strides = array<i32>} : memref<1x8x8xf32, #tpu.memory_space<vmem>>, vector<1x8x8xf32>,
    %40 = vector.extract_strided_slice %17 {offsets = [0, 0, 32], sizes = [4, 8, 32], strides = [1, 1, 1]} : vector<4x8x64xf32> to vector<4x8x32xf32>
    %41 = vector.extract_strided_slice %18 {offsets = [0, 0, 32], sizes = [4, 8, 32], strides = [1, 1, 1]} : vector<4x8x64xf32> to vector<4x8x32xf32>
    %42 = vector.extract_strided_slice %19 {offsets = [0, 0, 32], sizes = [4, 8, 32], strides = [1, 1, 1]} : vector<4x8x64xf32> to vector<4x8x32xf32>
    "tpu.trace_start"() <{level = 10 : i32, message = "tnd,tmd->tnm"}> : () -> ()
    %cst_27 = arith.constant dense<0.000000e+00> : vector<4x8x8xf32>
    %43 = tpu.matmul %40, %41, %cst_27 {dimension_numbers = #tpu.dot_dimension_numbers<[2], [2], [1], [1], [0, 0, 0, 1, 1, 1], [0], [0]>} : vector<4x8x32xf32>, vector<4x8x32xf32>, vector<4x8x8xf32> -> vector<4x8x8xf32>
    "tpu.trace_stop"() : () -> ()
    %cst_28 = arith.constant 0.176776692 : f32
    %44 = vector.broadcast %cst_28 : f32 to vector<4x8x8xf32>
    %45 = arith.mulf %43, %44 : vector<4x8x8xf32>
    %cst_29 = arith.constant dense<0xFF800000> : vector<4x8xf32>
    %46 = vector.multi_reduction <maximumf>, %45, %cst_29 [2] : vector<4x8x8xf32> to vector<4x8xf32>
    %47 = vector.shape_cast %46 : vector<4x8xf32> to vector<4x8x1xf32>
    %48 = vector.broadcast %47 : vector<4x8x1xf32> to vector<4x8x8xf32>
    %49 = arith.subf %45, %48 : vector<4x8x8xf32>
    %50 = math.exp %49 : vector<4x8x8xf32>
    %cst_30 = arith.constant dense<0.000000e+00> : vector<4x8xf32>
    %51 = vector.multi_reduction <add>, %50, %cst_30 [2] : vector<4x8x8xf32> to vector<4x8xf32>
    %52 = vector.shape_cast %51 : vector<4x8xf32> to vector<4x8x1xf32>
    %53 = tpu.reciprocal %52 : vector<4x8x1xf32> -> vector<4x8x1xf32>
    %54 = vector.broadcast %53 : vector<4x8x1xf32> to vector<4x8x8xf32>
    %55 = arith.mulf %50, %54 : vector<4x8x8xf32>
    "tpu.trace_start"() <{level = 10 : i32, message = "tnm,tmd->tnd"}> : () -> ()
    %cst_31 = arith.constant dense<0.000000e+00> : vector<4x8x32xf32>
    %56 = tpu.matmul %55, %42, %cst_31 {dimension_numbers = #tpu.dot_dimension_numbers<[2], [1], [1], [2], [0, 0, 0, 1, 1, 2], [0], [0]>} : vector<4x8x8xf32>, vector<4x8x32xf32>, vector<4x8x32xf32> -> vector<4x8x32xf32>
    "tpu.trace_stop"() : () -> ()
    %c0_32 = arith.constant 0 : index
    %c0_33 = arith.constant 0 : index
    %c32 = arith.constant 32 : index
    %57 = vector.load %arg8[%c0_32, %c0_33, %c32] : memref<4x8x64xf32, #tpu.memory_space<vmem>>, vector<4x8x32xf32>
    tpu.vector_store %arg8[%c0_32, %c0_33, %c32], %56 {strides = array<i32>} : memref<4x8x64xf32, #tpu.memory_space<vmem>>, vector<4x8x32xf32>,
    return
  }
  func.func @transform_0(%arg0: i32) -> (i32, i32, i32) {
    %c0_i32 = arith.constant 0 : i32
    %c0_i32_0 = arith.constant 0 : i32
    %c0_i32_1 = arith.constant 0 : i32
    return %arg0, %c0_i32, %c0_i32_0 : i32, i32, i32
  }
  func.func @transform_1(%arg0: i32) -> (i32, i32) {
    %c0_i32 = arith.constant 0 : i32
    %c0_i32_0 = arith.constant 0 : i32
    %c0_i32_1 = arith.constant 0 : i32
    return %c0_i32, %c0_i32_0 : i32, i32
  }
  func.func @transform_2(%arg0: i32) -> (i32, i32) {
    %c0_i32 = arith.constant 0 : i32
    %c0_i32_0 = arith.constant 0 : i32
    %c0_i32_1 = arith.constant 0 : i32
    return %c0_i32, %c0_i32_0 : i32, i32
  }
  func.func @transform_3(%arg0: i32) -> (i32, i32) {
    %c0_i32 = arith.constant 0 : i32
    %c0_i32_0 = arith.constant 0 : i32
    %c0_i32_1 = arith.constant 0 : i32
    return %c0_i32, %c0_i32_0 : i32, i32
  }
  func.func @transform_4(%arg0: i32) -> (i32, i32) {
    %c0_i32 = arith.constant 0 : i32
    %c0_i32_0 = arith.constant 0 : i32
    %c0_i32_1 = arith.constant 0 : i32
    return %c0_i32, %c0_i32_0 : i32, i32
  }
  func.func @transform_5(%arg0: i32) -> (i32, i32) {
    %c0_i32 = arith.constant 0 : i32
    %c0_i32_0 = arith.constant 0 : i32
    %c0_i32_1 = arith.constant 0 : i32
    return %c0_i32, %c0_i32_0 : i32, i32
  }
  func.func @transform_6(%arg0: i32) -> (i32, i32) {
    %c0_i32 = arith.constant 0 : i32
    %c0_i32_0 = arith.constant 0 : i32
    %c0_i32_1 = arith.constant 0 : i32
    return %c0_i32, %c0_i32_0 : i32, i32
  }
  func.func @transform_7(%arg0: i32) -> (i32, i32, i32) {
    %c0_i32 = arith.constant 0 : i32
    %c0_i32_0 = arith.constant 0 : i32
    %c0_i32_1 = arith.constant 0 : i32
    return %arg0, %c0_i32, %c0_i32_0 : i32, i32, i32
  }
  func.func @transform_8(%arg0: i32) -> (i32, i32, i32) {
    %c0_i32 = arith.constant 0 : i32
    %c0_i32_0 = arith.constant 0 : i32
    %c0_i32_1 = arith.constant 0 : i32
    return %arg0, %c0_i32, %c0_i32_0 : i32, i32, i32
  }
}

</mosaic_0001>

<llo_original>
// kernel: tpu_custom_call.1
$region0: #{tpu_custom_call.1}
  #allocation0 [shape = 'u32[]', space=smem, size = 0x4, offset = 0x4, fixed_abs, tag = 'smem constant byte address 0x4 - core index']
  #allocation1 [shape = 'u32[144,128]{1,0:T(1,128)}', space=vmem, size = 0x12000, scoped, tag = 'internal scratch']
  %s0 = inlined_call_operand.hbm [shape: f32[8,8,32], index: 0, kind: input, shape index: {}]
  %s1 = inlined_call_operand.hbm [shape: f32[32,64], index: 1, kind: input, shape index: {}]
  %s2 = inlined_call_operand.hbm [shape: f32[32,64], index: 2, kind: input, shape index: {}]
  %s3 = inlined_call_operand.hbm [shape: f32[32,64], index: 3, kind: input, shape index: {}]
  %s4 = inlined_call_operand.vmem [shape: f32[1,64], index: 4, kind: input, shape index: {}]
  %s5 = inlined_call_operand.vmem [shape: f32[1,64], index: 5, kind: input, shape index: {}]
  %s6 = inlined_call_operand.vmem [shape: f32[1,64], index: 6, kind: input, shape index: {}]
  %s7 = inlined_call_operand.hbm [shape: f32[8,8,64], index: 7, kind: output, shape index: {0}]
  %s8 = inlined_call_operand.hbm [shape: f32[2,8,8], index: 8, kind: output, shape index: {1}]
  %9 = xla_tuple %s7, %s8
  %s10 = sld [smem:[#allocation0]]
  $region85: #{tpu_custom_call.1} parent=0
    _
  %s12 = ssub.s32 1, %s10
  %s13 = scalar_select 0, %s12, %s10
  $region1: #{tpu_custom_call.1} parent=0
    #allocation2 [shape = 'u8[32768]{0}', space=vmem, size = 0x8000, scoped, tag = 'input window, operand 0']
    #allocation3 [shape = 's32[2]{0}', space=sflag, size = 0x8, scoped, tag = 'scoped memory for tpu_custom_call.1']
    #allocation4 [shape = 's32[2]{0}', space=sflag, size = 0x8, scoped, tag = 'scoped memory for tpu_custom_call.1']
    #allocation5 [shape = 'u8[16384]{0}', space=vmem, size = 0x4000, scoped, tag = 'input window, operand 1, single buffered']
    #allocation6 [shape = 's32[1]{0}', space=sflag, size = 0x4, scoped, tag = 'scoped memory for tpu_custom_call.1']
    #allocation7 [shape = 'u8[16384]{0}', space=vmem, size = 0x4000, scoped, tag = 'input window, operand 2, single buffered']
    #allocation8 [shape = 'u8[16384]{0}', space=vmem, size = 0x4000, scoped, tag = 'input window, operand 3, single buffered']
    #allocation9 [shape = 's32[1]{0}', space=sflag, size = 0x4, scoped, tag = 'scoped memory for tpu_custom_call.1']
    #allocation10 [shape = 'u8[32768]{0}', space=vmem, size = 0x8000, scoped, tag = 'output window, operand 0']
    #allocation11 [shape = 'u8[8192]{0}', space=vmem, size = 0x2000, scoped, tag = 'output window, operand 1']
    #allocation12 [shape = 's32[2]{0}', space=sflag, size = 0x8, scoped, tag = 'scoped memory for tpu_custom_call.1']
    %14 = vsyncpa [#allocation3], 0
    %s15 = scalar_lea.sflag [#allocation3], 1
    %16 = vsyncpa %s15, 0
    %17 = vsyncpa [#allocation6], 0
    %18 = vsyncpa [#allocation9], 0
    %19 = vsyncpa [#allocation4], 0
    %s20 = scalar_lea.sflag [#allocation4], 1
    %21 = vsyncpa %s20, 0
    %22 = vsyncpa [#allocation12], 0
    %s23 = scalar_lea.sflag [#allocation12], 1
    %24 = vsyncpa %s23, 0
    loop: start=0, step=1, limit=4
    $region2: #{tpu_custom_call.1} parent=1 // loop_pre_header
      _
    $region3: #{tpu_custom_call.1} parent=1 // loop_header
      %s26 = sphi 0, %s30
      %p27 = scmp.ge.s32.totalorder %s26, 4
      %s36 = sphi 0, %s38
      %s39 = sphi 0, %s36
      %s40 = sphi 0, %s39
      %s56 = sphi 0, %s40
      %s60 = sphi 0, %s60
      %s62 = sphi 0, %s60
      %s63 = sphi 0, %s62
      %s77 = sphi 0, %s63
      %s81 = sphi 0, %s81
      %s83 = sphi 0, %s81
      %s84 = sphi 0, %s83
      %s98 = sphi 0, %s84
      %s102 = sphi 0, %s102
      %s104 = sphi 0, %s102
      %s105 = sphi 0, %s104
      %s119 = sphi 0, %s105
      %s123 = sphi 0, %s123
      %s125 = sphi 0, %s123
      %s126 = sphi 0, %s125
      %s140 = sphi 0, %s126
      %s144 = sphi 0, %s144
      %s146 = sphi 0, %s144
      %s147 = sphi 0, %s146
      %s161 = sphi 0, %s147
      %s165 = sphi 0, %s165
      %s167 = sphi 0, %s165
      %s168 = sphi 0, %s167
      %s182 = sphi 0, %s168
      %s188 = sphi 0, %s190
      %s191 = sphi 0, %s188
      %s192 = sphi 0, %s191
      %s208 = sphi 0, %s192
      %s214 = sphi 0, %s216
      %s217 = sphi 0, %s214
      %s218 = sphi 0, %s217
      %s234 = sphi 0, %s218
    $region4: #{tpu_custom_call.1} parent=1 // loop_header_branch
      %29 = sbr.rel (%p27) target = $region8
    $region5: #{tpu_custom_call.1} parent=1 // loop_body
      %s31 = ssub.s32 %s26, 1
      %s32 = ssub.s32 %s26, 2
      %s33 = sadd.s32 %s26, 1
      %s34 = ssub.s32 %s26, %s33
      %p35 = scmp.eq.s32.totalorder %s34, 0
      %s37 = sadd.s32 %s36, 1
      %s38 = scalar_select %p35, %s36, %s37
      %p41 = pneg %p35
      %p42 = scmp.eq.s32.totalorder %s26, 1
      %p43 = por %p41, %p42
      %p44 = scmp.ne.s32.totalorder %s36, %s39
      %p45 = scmp.eq.s32.totalorder %s26, 0
      %p46 = por %p44, %p45
      %p47 = scmp.ne.s32.totalorder %s36, %s39
      %p48 = scmp.eq.s32.totalorder %s31, 1
      %p49 = por %p47, %p48
      %p50 = scmp.ne.s32.totalorder %s39, %s40
      %p51 = scmp.eq.s32.totalorder %s31, 0
      %p52 = por %p50, %p51
      %p53 = scmp.ne.s32.totalorder %s39, %s40
      %p54 = scmp.eq.s32.totalorder %s32, 1
      %p55 = por %p53, %p54
      %p57 = scmp.ne.s32.totalorder %s40, %s56
      %p58 = scmp.eq.s32.totalorder %s32, 0
      %p59 = por %p57, %p58
      %s61 = sadd.s32 %s60, 1
      %p64 = scmp.eq.s32.totalorder %s26, 1
      %p65 = scmp.ne.s32.totalorder %s60, %s62
      %p66 = scmp.eq.s32.totalorder %s26, 0
      %p67 = por %p65, %p66
      %p68 = scmp.ne.s32.totalorder %s60, %s62
      %p69 = scmp.eq.s32.totalorder %s31, 1
      %p70 = por %p68, %p69
      %p71 = scmp.ne.s32.totalorder %s62, %s63
      %p72 = scmp.eq.s32.totalorder %s31, 0
      %p73 = por %p71, %p72
      %p74 = scmp.ne.s32.totalorder %s62, %s63
      %p75 = scmp.eq.s32.totalorder %s32, 1
      %p76 = por %p74, %p75
      %p78 = scmp.ne.s32.totalorder %s63, %s77
      %p79 = scmp.eq.s32.totalorder %s32, 0
      %p80 = por %p78, %p79
      %s82 = sadd.s32 %s81, 1
      %p85 = scmp.eq.s32.totalorder %s26, 1
      %p86 = scmp.ne.s32.totalorder %s81, %s83
      %p87 = scmp.eq.s32.totalorder %s26, 0
      %p88 = por %p86, %p87
      %p89 = scmp.ne.s32.totalorder %s81, %s83
      %p90 = scmp.eq.s32.totalorder %s31, 1
      %p91 = por %p89, %p90
      %p92 = scmp.ne.s32.totalorder %s83, %s84
      %p93 = scmp.eq.s32.totalorder %s31, 0
      %p94 = por %p92, %p93
      %p95 = scmp.ne.s32.totalorder %s83, %s84
      %p96 = scmp.eq.s32.totalorder %s32, 1
      %p97 = por %p95, %p96
      %p99 = scmp.ne.s32.totalorder %s84, %s98
      %p100 = scmp.eq.s32.totalorder %s32, 0
      %p101 = por %p99, %p100
      %s103 = sadd.s32 %s102, 1
      %p106 = scmp.eq.s32.totalorder %s26, 1
      %p107 = scmp.ne.s32.totalorder %s102, %s104
      %p108 = scmp.eq.s32.totalorder %s26, 0
      %p109 = por %p107, %p108
      %p110 = scmp.ne.s32.totalorder %s102, %s104
      %p111 = scmp.eq.s32.totalorder %s31, 1
      %p112 = por %p110, %p111
      %p113 = scmp.ne.s32.totalorder %s104, %s105
      %p114 = scmp.eq.s32.totalorder %s31, 0
      %p115 = por %p113, %p114
      %p116 = scmp.ne.s32.totalorder %s104, %s105
      %p117 = scmp.eq.s32.totalorder %s32, 1
      %p118 = por %p116, %p117
      %p120 = scmp.ne.s32.totalorder %s105, %s119
      %p121 = scmp.eq.s32.totalorder %s32, 0
      %p122 = por %p120, %p121
      %s124 = sadd.s32 %s123, 1
      %p127 = scmp.eq.s32.totalorder %s26, 1
      %p128 = scmp.ne.s32.totalorder %s123, %s125
      %p129 = scmp.eq.s32.totalorder %s26, 0
      %p130 = por %p128, %p129
      %p131 = scmp.ne.s32.totalorder %s123, %s125
      %p132 = scmp.eq.s32.totalorder %s31, 1
      %p133 = por %p131, %p132
      %p134 = scmp.ne.s32.totalorder %s125, %s126
      %p135 = scmp.eq.s32.totalorder %s31, 0
      %p136 = por %p134, %p135
      %p137 = scmp.ne.s32.totalorder %s125, %s126
      %p138 = scmp.eq.s32.totalorder %s32, 1
      %p139 = por %p137, %p138
      %p141 = scmp.ne.s32.totalorder %s126, %s140
      %p142 = scmp.eq.s32.totalorder %s32, 0
      %p143 = por %p141, %p142
      %s145 = sadd.s32 %s144, 1
      %p148 = scmp.eq.s32.totalorder %s26, 1
      %p149 = scmp.ne.s32.totalorder %s144, %s146
      %p150 = scmp.eq.s32.totalorder %s26, 0
      %p151 = por %p149, %p150
      %p152 = scmp.ne.s32.totalorder %s144, %s146
      %p153 = scmp.eq.s32.totalorder %s31, 1
      %p154 = por %p152, %p153
      %p155 = scmp.ne.s32.totalorder %s146, %s147
      %p156 = scmp.eq.s32.totalorder %s31, 0
      %p157 = por %p155, %p156
      %p158 = scmp.ne.s32.totalorder %s146, %s147
      %p159 = scmp.eq.s32.totalorder %s32, 1
      %p160 = por %p158, %p159
      %p162 = scmp.ne.s32.totalorder %s147, %s161
      %p163 = scmp.eq.s32.totalorder %s32, 0
      %p164 = por %p162, %p163
      %s166 = sadd.s32 %s165, 1
      %p169 = scmp.eq.s32.totalorder %s26, 1
      %p170 = scmp.ne.s32.totalorder %s165, %s167
      %p171 = scmp.eq.s32.totalorder %s26, 0
      %p172 = por %p170, %p171
      %p173 = scmp.ne.s32.totalorder %s165, %s167
      %p174 = scmp.eq.s32.totalorder %s31, 1
      %p175 = por %p173, %p174
      %p176 = scmp.ne.s32.totalorder %s167, %s168
      %p177 = scmp.eq.s32.totalorder %s31, 0
      %p178 = por %p176, %p177
      %p179 = scmp.ne.s32.totalorder %s167, %s168
      %p180 = scmp.eq.s32.totalorder %s32, 1
      %p181 = por %p179, %p180
      %p183 = scmp.ne.s32.totalorder %s168, %s182
      %p184 = scmp.eq.s32.totalorder %s32, 0
      %p185 = por %p183, %p184
      %s186 = ssub.s32 %s26, %s33
      %p187 = scmp.eq.s32.totalorder %s186, 0
      %s189 = sadd.s32 %s188, 1
      %s190 = scalar_select %p187, %s188, %s189
      %p193 = pneg %p187
      %p194 = scmp.eq.s32.totalorder %s26, 1
      %p195 = por %p193, %p194
      %p196 = scmp.ne.s32.totalorder %s188, %s191
      %p197 = scmp.eq.s32.totalorder %s26, 0
      %p198 = por %p196, %p197
      %p199 = scmp.ne.s32.totalorder %s188, %s191
      %p200 = scmp.eq.s32.totalorder %s31, 1
      %p201 = por %p199, %p200
      %p202 = scmp.ne.s32.totalorder %s191, %s192
      %p203 = scmp.eq.s32.totalorder %s31, 0
      %p204 = por %p202, %p203
      %p205 = scmp.ne.s32.totalorder %s191, %s192
      %p206 = scmp.eq.s32.totalorder %s32, 1
      %p207 = por %p205, %p206
      %p209 = scmp.ne.s32.totalorder %s192, %s208
      %p210 = scmp.eq.s32.totalorder %s32, 0
      %p211 = por %p209, %p210
      %s212 = ssub.s32 %s26, %s33
      %p213 = scmp.eq.s32.totalorder %s212, 0
      %s215 = sadd.s32 %s214, 1
      %s216 = scalar_select %p213, %s214, %s215
      %p219 = pneg %p213
      %p220 = scmp.eq.s32.totalorder %s26, 1
      %p221 = por %p219, %p220
      %p222 = scmp.ne.s32.totalorder %s214, %s217
      %p223 = scmp.eq.s32.totalorder %s26, 0
      %p224 = por %p222, %p223
      %p225 = scmp.ne.s32.totalorder %s214, %s217
      %p226 = scmp.eq.s32.totalorder %s31, 1
      %p227 = por %p225, %p226
      %p228 = scmp.ne.s32.totalorder %s217, %s218
      %p229 = scmp.eq.s32.totalorder %s31, 0
      %p230 = por %p228, %p229
      %p231 = scmp.ne.s32.totalorder %s217, %s218
      %p232 = scmp.eq.s32.totalorder %s32, 1
      %p233 = por %p231, %p232
      %p235 = scmp.ne.s32.totalorder %s218, %s234
      %p236 = scmp.eq.s32.totalorder %s32, 0
      %p237 = por %p235, %p236
      %p238 = scmp.le.s32.totalorder 1, %s26
      %p239 = scmp.lt.s32.totalorder %s26, 3
      %p240 = pnand %p238, %p239
      %p241 = pneg %p240
      // Predicated region
      $region9: #{tpu_custom_call.1} parent=5 // pred_check
        _
      $region10: #{tpu_custom_call.1} parent=5 // pred_check_branch
        %243 = sbr.rel (%p240) target = $region12
      $region11: #{tpu_custom_call.1} parent=5 // pred_region
        %s244 = ssub.s32 %s26, 1
        // Predicated region
        $region13: #{tpu_custom_call.1} parent=11 // pred_check
          %p245 = pneg %p73
        $region14: #{tpu_custom_call.1} parent=11 // pred_check_branch
          %247 = sbr.rel (%p245) target = $region16
        $region15: #{tpu_custom_call.1} parent=11 // pred_region
          %s249 = ssub.s32 512, 512
          %250 = vsyncadd [#allocation6], %s249
          %s251 = sshll.u32 [#allocation5], 4
          %s252 = int_to_ptr.vmem [resolvable:$true] %s251
          %257 = dma.hbm_to_vmem [thread:$0]  %s1, 512, %s252, [#allocation6], 128, 128, 8
        $region16: #{tpu_custom_call.1} parent=11 // pred_fallthru
          _
        // Predicated region
        $region17: #{tpu_custom_call.1} parent=11 // pred_check
          %p258 = pneg %p94
        $region18: #{tpu_custom_call.1} parent=11 // pred_check_branch
          %260 = sbr.rel (%p258) target = $region20
        $region19: #{tpu_custom_call.1} parent=11 // pred_region
          %s262 = ssub.s32 512, 512
          %263 = vsyncadd [#allocation6], %s262
          %s264 = sshll.u32 [#allocation7], 4
          %s265 = int_to_ptr.vmem [resolvable:$true] %s264
          %270 = dma.hbm_to_vmem [thread:$0]  %s2, 512, %s265, [#allocation6], 128, 128, 8
        $region20: #{tpu_custom_call.1} parent=11 // pred_fallthru
          _
        // Predicated region
        $region21: #{tpu_custom_call.1} parent=11 // pred_check
          %p271 = pneg %p115
        $region22: #{tpu_custom_call.1} parent=11 // pred_check_branch
          %273 = sbr.rel (%p271) target = $region24
        $region23: #{tpu_custom_call.1} parent=11 // pred_region
          %s275 = ssub.s32 512, 512
          %276 = vsyncadd [#allocation9], %s275
          %s277 = sshll.u32 [#allocation8], 4
          %s278 = int_to_ptr.vmem [resolvable:$true] %s277
          %283 = dma.hbm_to_vmem [thread:$0]  %s3, 512, %s278, [#allocation9], 128, 128, 8
        $region24: #{tpu_custom_call.1} parent=11 // pred_fallthru
          _
        // Predicated region
        $region25: #{tpu_custom_call.1} parent=11 // pred_check
          %p284 = pneg %p136
        $region26: #{tpu_custom_call.1} parent=11 // pred_check_branch
          %286 = sbr.rel (%p284) target = $region28
        $region27: #{tpu_custom_call.1} parent=11 // pred_region
          _
        $region28: #{tpu_custom_call.1} parent=11 // pred_fallthru
          _
        // Predicated region
        $region29: #{tpu_custom_call.1} parent=11 // pred_check
          %p287 = pneg %p157
        $region30: #{tpu_custom_call.1} parent=11 // pred_check_branch
          %289 = sbr.rel (%p287) target = $region32
        $region31: #{tpu_custom_call.1} parent=11 // pred_region
          _
        $region32: #{tpu_custom_call.1} parent=11 // pred_fallthru
          _
        // Predicated region
        $region33: #{tpu_custom_call.1} parent=11 // pred_check
          %p290 = pneg %p178
        $region34: #{tpu_custom_call.1} parent=11 // pred_check_branch
          %292 = sbr.rel (%p290) target = $region36
        $region35: #{tpu_custom_call.1} parent=11 // pred_region
          _
        $region36: #{tpu_custom_call.1} parent=11 // pred_fallthru
          _
      $region12: #{tpu_custom_call.1} parent=5 // pred_fallthru
        _
      %p293 = scmp.lt.s32.totalorder %s26, 2
      // Predicated region
      $region37: #{tpu_custom_call.1} parent=5 // pred_check
        %p294 = pneg %p293
      $region38: #{tpu_custom_call.1} parent=5 // pred_check_branch
        %296 = sbr.rel (%p294) target = $region40
      $region39: #{tpu_custom_call.1} parent=5 // pred_region
        // Predicated region
        $region41: #{tpu_custom_call.1} parent=39 // pred_check
          %p297 = pneg %p46
        $region42: #{tpu_custom_call.1} parent=39 // pred_check_branch
          %299 = sbr.rel (%p297) target = $region44
        $region43: #{tpu_custom_call.1} parent=39 // pred_region
          %s300 = sand.u32 %s36, 1
          %s301 = scalar_lea.sflag [#allocation3], %s300
          %s302 = sand.u32 %s36, 1
          %s303 = smul.addr %s302, 32
          %s304 = scalar_lea.vmem [#allocation2], %s303
          %s305 = smul.u32 4, %s26
          %s307 = ssub.s32 512, 512
          %308 = vsyncadd %s301, %s307
          %s309 = smul.addr %s305, 128
          %s310 = scalar_lea.hbm %s0, %s309
          %s311 = sshll.u32 %s304, 4
          %s312 = int_to_ptr.vmem [resolvable:$true] %s311
          %317 = dma.hbm_to_vmem [thread:$0]  %s310, 512, %s312, %s301, 128, 128, 8
        $region44: #{tpu_custom_call.1} parent=39 // pred_fallthru
          _
      $region40: #{tpu_custom_call.1} parent=5 // pred_fallthru
        _
      %p318 = scmp.le.s32.totalorder 1, %s26
      %p319 = scmp.lt.s32.totalorder %s26, 3
      %p320 = pnand %p318, %p319
      %p321 = pneg %p320
      // Predicated region
      $region45: #{tpu_custom_call.1} parent=5 // pred_check
        _
      $region46: #{tpu_custom_call.1} parent=5 // pred_check_branch
        %323 = sbr.rel (%p320) target = $region48
      $region47: #{tpu_custom_call.1} parent=5 // pred_region
        %s324 = ssub.s32 %s26, 1
        %s325 = sand.u32 %s39, 1
        %s326 = scalar_lea.sflag [#allocation3], %s325
        %s327 = sand.u32 %s39, 1
        %s328 = smul.addr %s327, 32
        %s329 = scalar_lea.vmem [#allocation2], %s328
        // Predicated region
        $region49: #{tpu_custom_call.1} parent=47 // pred_check
          %p330 = pneg %p52
        $region50: #{tpu_custom_call.1} parent=47 // pred_check_branch
          %332 = sbr.rel (%p330) target = $region52
        $region51: #{tpu_custom_call.1} parent=47 // pred_region
          %333 = dma.done %s326, 512
        $region52: #{tpu_custom_call.1} parent=47 // pred_fallthru
          _
        // Predicated region
        $region53: #{tpu_custom_call.1} parent=47 // pred_check
          %p334 = pneg %p73
        $region54: #{tpu_custom_call.1} parent=47 // pred_check_branch
          %336 = sbr.rel (%p334) target = $region56
        $region55: #{tpu_custom_call.1} parent=47 // pred_region
          %337 = dma.done [#allocation6], 512
        $region56: #{tpu_custom_call.1} parent=47 // pred_fallthru
          _
        // Predicated region
        $region57: #{tpu_custom_call.1} parent=47 // pred_check
          %p338 = pneg %p94
        $region58: #{tpu_custom_call.1} parent=47 // pred_check_branch
          %340 = sbr.rel (%p338) target = $region60
        $region59: #{tpu_custom_call.1} parent=47 // pred_region
          %341 = dma.done [#allocation6], 512
        $region60: #{tpu_custom_call.1} parent=47 // pred_fallthru
          _
        // Predicated region
        $region61: #{tpu_custom_call.1} parent=47 // pred_check
          %p342 = pneg %p115
        $region62: #{tpu_custom_call.1} parent=47 // pred_check_branch
          %344 = sbr.rel (%p342) target = $region64
        $region63: #{tpu_custom_call.1} parent=47 // pred_region
          %345 = dma.done [#allocation9], 512
        $region64: #{tpu_custom_call.1} parent=47 // pred_fallthru
          _
        %s346 = sand.u32 %s39, 1
        %s347 = scalar_lea.sflag [#allocation3], %s346
        %s348 = sand.u32 %s39, 1
        %s349 = smul.addr %s348, 32
        %s350 = scalar_lea.vmem [#allocation2], %s349
        %p351 = pneg %p52
        %p352 = pneg %p49
        %p353 = pneg %p73
        %p354 = pneg %p70
        %p355 = pneg %p94
        %p356 = pneg %p91
        %p357 = pneg %p115
        %p358 = pneg %p112
        %p359 = pneg %p136
        %p360 = pneg %p133
        %p361 = pneg %p157
        %p362 = pneg %p154
        %p363 = pneg %p178
        %p364 = pneg %p175
        %p365 = pneg %p204
        %p366 = pneg %p201
        %s367 = sand.u32 %s191, 1
        %s368 = scalar_lea.sflag [#allocation4], %s367
        %s369 = sand.u32 %s191, 1
        %s370 = smul.addr %s369, 32
        %s371 = scalar_lea.vmem [#allocation10], %s370
        %p372 = pneg %p230
        %p373 = pneg %p227
        %s374 = sand.u32 %s217, 1
        %s375 = scalar_lea.sflag [#allocation12], %s374
        %s376 = sand.u32 %s217, 1
        %s377 = smul.addr %s376, 8
        %s378 = scalar_lea.vmem [#allocation11], %s377
        %s379 = smul.u32 4, %s31
        %s380 = smul.u32 4, %s31
        %v381 = vld [vmem:[%s329] sm:$0xff]
        %v382 = vld [vmem:[%s329 + $0x8] sm:$0xff]
        %v383 = vld [vmem:[%s329 + $0x10] sm:$0xff]
        %v384 = vld [vmem:[%s329 + $0x18] sm:$0xff]
        %v385 = vld [vmem:[#allocation5] sm:$0xff]
        %v386 = vld [vmem:[#allocation5 + $0x8] sm:$0xff]
        %v387 = vld [vmem:[#allocation5 + $0x10] sm:$0xff]
        %v388 = vld [vmem:[#allocation5 + $0x18] sm:$0xff]
        %v389 = vld [vmem:[%s4] sm:$0x1]
        %v391 = vlaneseq
        %v392 = vshrl.u32 %v391, 7
        %v393 = vsub.s32 0, %v392
        %v394 = vrot.slane %v389, %v393
        %vm396 = vcmask 261120
        %v398 = vsel %vm396, %v381, 0
        %v401 = vsel %vm396, %v382, 0
        %v404 = vsel %vm396, %v383, 0
        %v407 = vsel %vm396, %v384, 0
        %409 = vmatprep.subr.mxu0 0.0
        %410 = vmatpush1.msra.mxu0 %v385
        %411 = vmatprep.subr.mxu0 0.0
        %412 = vmatpush1.msra.mxu0 %v386
        %413 = vmatprep.subr.mxu0 0.0
        %414 = vmatpush1.msra.mxu0 %v387
        %415 = vmatprep.subr.mxu0 0.0
        %416 = vmatpush1.msra.mxu0 %v388
        %417 = vmatprep.subr.mxu0 0.0
        %418 = vmatpush1.msra.mxu0 0.0
        %419 = vmatprep.subr.mxu0 0.0
        %420 = vmatpush1.msra.mxu0 0.0
        %421 = vmatprep.subr.mxu0 0.0
        %422 = vmatpush1.msra.mxu0 0.0
        %423 = vmatprep.subr.mxu0 0.0
        %424 = vmatpush1.msra.mxu0 0.0
        %425 = vmatprep.subr.mxu0 0.0
        %426 = vmatpush1.msra.mxu0 0.0
        %427 = vmatprep.subr.mxu0 0.0
        %428 = vmatpush1.msra.mxu0 0.0
        %429 = vmatprep.subr.mxu0 0.0
        %430 = vmatpush1.msra.mxu0 0.0
        %431 = vmatprep.subr.mxu0 0.0
        %432 = vmatpush1.msra.mxu0 0.0
        %433 = vmatprep.subr.mxu0 0.0
        %434 = vmatpush1.msra.mxu0 0.0
        %435 = vmatprep.subr.mxu0 0.0
        %436 = vmatpush1.msra.mxu0 0.0
        %437 = vmatprep.subr.mxu0 0.0
        %438 = vmatpush1.msra.mxu0 0.0
        %439 = vmatprep.subr.mxu0 0.0
        %440 = vmatpush1.msra.mxu0 0.0
        %441 = vmatprep.subr.mxu0 0.0
        %442 = vmatpush1.msra.mxu0 0.0
        %443 = vmatprep.subr.mxu0 0.0
        %444 = vmatpush1.msra.mxu0 0.0
        %445 = vmatprep.subr.mxu0 0.0
        %446 = vmatpush1.msra.mxu0 0.0
        %447 = vmatprep.subr.mxu0 0.0
        %448 = vmatpush1.msra.mxu0 0.0
        %449 = vmatprep.subr.mxu0 0.0
        %450 = vmatpush1.msra.mxu0 0.0
        %451 = vmatprep.subr.mxu0 0.0
        %452 = vmatpush1.msra.mxu0 0.0
        %453 = vmatprep.subr.mxu0 0.0
        %454 = vmatpush1.msra.mxu0 0.0
        %455 = vmatprep.subr.mxu0 0.0
        %456 = vmatpush1.msra.mxu0 0.0
        %457 = vmatprep.subr.mxu0 0.0
        %458 = vmatpush1.msra.mxu0 0.0
        %459 = vmatprep.subr.mxu0 0.0
        %460 = vmatpush1.msra.mxu0 0.0
        %461 = vmatprep.subr.mxu0 0.0
        %462 = vmatpush1.msra.mxu0 0.0
        %463 = vmatprep.subr.mxu0 0.0
        %464 = vmatpush1.msra.mxu0 0.0
        %465 = vmatprep.subr.mxu0 0.0
        %466 = vmatpush1.msra.mxu0 0.0
        %467 = vmatprep.subr.mxu0 0.0
        %468 = vmatpush1.msra.mxu0 0.0
        %469 = vmatprep.subr.mxu0 0.0
        %470 = vmatpush1.msra.mxu0 0.0
        %471 = vmatprep.subr.mxu0 0.0
        %472 = vmatpush1.msra.mxu0 0.0
        %473 = vmatprep.mubr.f32.mxu0 0.0
        %474 = vmatmul.mubr.f32.gmra.mrb[0].mxu0 %v398
        %v475 = vpop.f32.mrb[0].mxu0
        %v476 = vadd.f32 %v394, %v475
        %v477 = vpop.f32.mrb[0].mxu0
        %478 = vmatprep.mubr.f32.mxu0 0.0
        %479 = vmatmul.mubr.f32.gmra.mrb[0].mxu0 %v401
        %v480 = vpop.f32.mrb[0].mxu0
        %v481 = vadd.f32 %v394, %v480
        %v482 = vpop.f32.mrb[0].mxu0
        %483 = vmatprep.mubr.f32.mxu0 0.0
        %484 = vmatmul.mubr.f32.gmra.mrb[0].mxu0 %v404
        %v485 = vpop.f32.mrb[0].mxu0
        %v486 = vadd.f32 %v394, %v485
        %v487 = vpop.f32.mrb[0].mxu0
        %488 = vmatprep.mubr.f32.mxu0 0.0
        %489 = vmatmul.mubr.f32.gmra.mrb[0].mxu0 %v407
        %v490 = vpop.f32.mrb[0].mxu0
        %v491 = vadd.f32 %v394, %v490
        %v492 = vpop.f32.mrb[0].mxu0
        %493 = vdwg.mxu0
        %v494 = vld [vmem:[#allocation7] sm:$0xff]
        %v495 = vld [vmem:[#allocation7 + $0x8] sm:$0xff]
        %v496 = vld [vmem:[#allocation7 + $0x10] sm:$0xff]
        %v497 = vld [vmem:[#allocation7 + $0x18] sm:$0xff]
        %v498 = vld [vmem:[%s5] sm:$0x1]
        %v500 = vlaneseq
        %v501 = vshrl.u32 %v500, 7
        %v502 = vsub.s32 0, %v501
        %v503 = vrot.slane %v498, %v502
        %505 = vmatprep.subr.mxu0 0.0
        %506 = vmatpush1.msra.mxu0 %v494
        %507 = vmatprep.subr.mxu0 0.0
        %508 = vmatpush1.msra.mxu0 %v495
        %509 = vmatprep.subr.mxu0 0.0
        %510 = vmatpush1.msra.mxu0 %v496
        %511 = vmatprep.subr.mxu0 0.0
        %512 = vmatpush1.msra.mxu0 %v497
        %513 = vmatprep.subr.mxu0 0.0
        %514 = vmatpush1.msra.mxu0 0.0
        %515 = vmatprep.subr.mxu0 0.0
        %516 = vmatpush1.msra.mxu0 0.0
        %517 = vmatprep.subr.mxu0 0.0
        %518 = vmatpush1.msra.mxu0 0.0
        %519 = vmatprep.subr.mxu0 0.0
        %520 = vmatpush1.msra.mxu0 0.0
        %521 = vmatprep.subr.mxu0 0.0
        %522 = vmatpush1.msra.mxu0 0.0
        %523 = vmatprep.subr.mxu0 0.0
        %524 = vmatpush1.msra.mxu0 0.0
        %525 = vmatprep.subr.mxu0 0.0
        %526 = vmatpush1.msra.mxu0 0.0
        %527 = vmatprep.subr.mxu0 0.0
        %528 = vmatpush1.msra.mxu0 0.0
        %529 = vmatprep.subr.mxu0 0.0
        %530 = vmatpush1.msra.mxu0 0.0
        %531 = vmatprep.subr.mxu0 0.0
        %532 = vmatpush1.msra.mxu0 0.0
        %533 = vmatprep.subr.mxu0 0.0
        %534 = vmatpush1.msra.mxu0 0.0
        %535 = vmatprep.subr.mxu0 0.0
        %536 = vmatpush1.msra.mxu0 0.0
        %537 = vmatprep.subr.mxu0 0.0
        %538 = vmatpush1.msra.mxu0 0.0
        %539 = vmatprep.subr.mxu0 0.0
        %540 = vmatpush1.msra.mxu0 0.0
        %541 = vmatprep.subr.mxu0 0.0
        %542 = vmatpush1.msra.mxu0 0.0
        %543 = vmatprep.subr.mxu0 0.0
        %544 = vmatpush1.msra.mxu0 0.0
        %545 = vmatprep.subr.mxu0 0.0
        %546 = vmatpush1.msra.mxu0 0.0
        %547 = vmatprep.subr.mxu0 0.0
        %548 = vmatpush1.msra.mxu0 0.0
        %549 = vmatprep.subr.mxu0 0.0
        %550 = vmatpush1.msra.mxu0 0.0
        %551 = vmatprep.subr.mxu0 0.0
        %552 = vmatpush1.msra.mxu0 0.0
        %553 = vmatprep.subr.mxu0 0.0
        %554 = vmatpush1.msra.mxu0 0.0
        %555 = vmatprep.subr.mxu0 0.0
        %556 = vmatpush1.msra.mxu0 0.0
        %557 = vmatprep.subr.mxu0 0.0
        %558 = vmatpush1.msra.mxu0 0.0
        %559 = vmatprep.subr.mxu0 0.0
        %560 = vmatpush1.msra.mxu0 0.0
        %561 = vmatprep.subr.mxu0 0.0
        %562 = vmatpush1.msra.mxu0 0.0
        %563 = vmatprep.subr.mxu0 0.0
        %564 = vmatpush1.msra.mxu0 0.0
        %565 = vmatprep.subr.mxu0 0.0
        %566 = vmatpush1.msra.mxu0 0.0
        %567 = vmatprep.subr.mxu0 0.0
        %568 = vmatpush1.msra.mxu0 0.0
        %569 = vmatprep.mubr.f32.mxu0 0.0
        %570 = vmatmul.mubr.f32.gmra.mrb[0].mxu0 %v398
        %v571 = vpop.f32.mrb[0].mxu0
        %v572 = vadd.f32 %v503, %v571
        %v573 = vpop.f32.mrb[0].mxu0
        %574 = vmatprep.mubr.f32.mxu0 0.0
        %575 = vmatmul.mubr.f32.gmra.mrb[0].mxu0 %v401
        %v576 = vpop.f32.mrb[0].mxu0
        %v577 = vadd.f32 %v503, %v576
        %v578 = vpop.f32.mrb[0].mxu0
        %579 = vmatprep.mubr.f32.mxu0 0.0
        %580 = vmatmul.mubr.f32.gmra.mrb[0].mxu0 %v404
        %v581 = vpop.f32.mrb[0].mxu0
        %v582 = vadd.f32 %v503, %v581
        %v583 = vpop.f32.mrb[0].mxu0
        %584 = vmatprep.mubr.f32.mxu0 0.0
        %585 = vmatmul.mubr.f32.gmra.mrb[0].mxu0 %v407
        %v586 = vpop.f32.mrb[0].mxu0
        %v587 = vadd.f32 %v503, %v586
        %v588 = vpop.f32.mrb[0].mxu0
        %589 = vdwg.mxu0
        %v590 = vld [vmem:[#allocation8] sm:$0xff]
        %v591 = vld [vmem:[#allocation8 + $0x8] sm:$0xff]
        %v592 = vld [vmem:[#allocation8 + $0x10] sm:$0xff]
        %v593 = vld [vmem:[#allocation8 + $0x18] sm:$0xff]
        %v594 = vld [vmem:[%s6] sm:$0x1]
        %v596 = vlaneseq
        %v597 = vshrl.u32 %v596, 7
        %v598 = vsub.s32 0, %v597
        %v599 = vrot.slane %v594, %v598
        %601 = vmatprep.subr.mxu0 0.0
        %602 = vmatpush1.msra.mxu0 %v590
        %603 = vmatprep.subr.mxu0 0.0
        %604 = vmatpush1.msra.mxu0 %v591
        %605 = vmatprep.subr.mxu0 0.0
        %606 = vmatpush1.msra.mxu0 %v592
        %607 = vmatprep.subr.mxu0 0.0
        %608 = vmatpush1.msra.mxu0 %v593
        %609 = vmatprep.subr.mxu0 0.0
        %610 = vmatpush1.msra.mxu0 0.0
        %611 = vmatprep.subr.mxu0 0.0
        %612 = vmatpush1.msra.mxu0 0.0
        %613 = vmatprep.subr.mxu0 0.0
        %614 = vmatpush1.msra.mxu0 0.0
        %615 = vmatprep.subr.mxu0 0.0
        %616 = vmatpush1.msra.mxu0 0.0
        %617 = vmatprep.subr.mxu0 0.0
        %618 = vmatpush1.msra.mxu0 0.0
        %619 = vmatprep.subr.mxu0 0.0
        %620 = vmatpush1.msra.mxu0 0.0
        %621 = vmatprep.subr.mxu0 0.0
        %622 = vmatpush1.msra.mxu0 0.0
        %623 = vmatprep.subr.mxu0 0.0
        %624 = vmatpush1.msra.mxu0 0.0
        %625 = vmatprep.subr.mxu0 0.0
        %626 = vmatpush1.msra.mxu0 0.0
        %627 = vmatprep.subr.mxu0 0.0
        %628 = vmatpush1.msra.mxu0 0.0
        %629 = vmatprep.subr.mxu0 0.0
        %630 = vmatpush1.msra.mxu0 0.0
        %631 = vmatprep.subr.mxu0 0.0
        %632 = vmatpush1.msra.mxu0 0.0
        %633 = vmatprep.subr.mxu0 0.0
        %634 = vmatpush1.msra.mxu0 0.0
        %635 = vmatprep.subr.mxu0 0.0
        %636 = vmatpush1.msra.mxu0 0.0
        %637 = vmatprep.subr.mxu0 0.0
        %638 = vmatpush1.msra.mxu0 0.0
        %639 = vmatprep.subr.mxu0 0.0
        %640 = vmatpush1.msra.mxu0 0.0
        %641 = vmatprep.subr.mxu0 0.0
        %642 = vmatpush1.msra.mxu0 0.0
        %643 = vmatprep.subr.mxu0 0.0
        %644 = vmatpush1.msra.mxu0 0.0
        %645 = vmatprep.subr.mxu0 0.0
        %646 = vmatpush1.msra.mxu0 0.0
        %647 = vmatprep.subr.mxu0 0.0
        %648 = vmatpush1.msra.mxu0 0.0
        %649 = vmatprep.subr.mxu0 0.0
        %650 = vmatpush1.msra.mxu0 0.0
        %651 = vmatprep.subr.mxu0 0.0
        %652 = vmatpush1.msra.mxu0 0.0
        %653 = vmatprep.subr.mxu0 0.0
        %654 = vmatpush1.msra.mxu0 0.0
        %655 = vmatprep.subr.mxu0 0.0
        %656 = vmatpush1.msra.mxu0 0.0
        %657 = vmatprep.subr.mxu0 0.0
        %658 = vmatpush1.msra.mxu0 0.0
        %659 = vmatprep.subr.mxu0 0.0
        %660 = vmatpush1.msra.mxu0 0.0
        %661 = vmatprep.subr.mxu0 0.0
        %662 = vmatpush1.msra.mxu0 0.0
        %663 = vmatprep.subr.mxu0 0.0
        %664 = vmatpush1.msra.mxu0 0.0
        %665 = vmatprep.mubr.f32.mxu0 0.0
        %666 = vmatmul.mubr.f32.gmra.mrb[0].mxu0 %v398
        %v667 = vpop.f32.mrb[0].mxu0
        %v668 = vadd.f32 %v599, %v667
        %v669 = vpop.f32.mrb[0].mxu0
        %670 = vmatprep.mubr.f32.mxu0 0.0
        %671 = vmatmul.mubr.f32.gmra.mrb[0].mxu0 %v401
        %v672 = vpop.f32.mrb[0].mxu0
        %v673 = vadd.f32 %v599, %v672
        %v674 = vpop.f32.mrb[0].mxu0
        %675 = vmatprep.mubr.f32.mxu0 0.0
        %676 = vmatmul.mubr.f32.gmra.mrb[0].mxu0 %v404
        %v677 = vpop.f32.mrb[0].mxu0
        %v678 = vadd.f32 %v599, %v677
        %v679 = vpop.f32.mrb[0].mxu0
        %680 = vmatprep.mubr.f32.mxu0 0.0
        %681 = vmatmul.mubr.f32.gmra.mrb[0].mxu0 %v407
        %v682 = vpop.f32.mrb[0].mxu0
        %v683 = vadd.f32 %v599, %v682
        %v684 = vpop.f32.mrb[0].mxu0
        %685 = vdwg.mxu0
        %v687 = vsel %vm396, %v476, 0
        %v690 = vsel %vm396, %v572, 0
        %692 = vmatprep.subr.mxu0 0.0
        %693 = vmatpush1.xpose.msra.mxu0 %v690
        %694 = vmatprep.subr.mxu0 0.0
        %695 = vmatpush1.xpose.msra.mxu0 0.0
        %696 = vmatprep.subr.mxu0 0.0
        %697 = vmatpush1.xpose.msra.mxu0 0.0
        %698 = vmatprep.subr.mxu0 0.0
        %699 = vmatpush1.xpose.msra.mxu0 0.0
        %700 = vmatprep.subr.mxu0 0.0
        %701 = vmatpush1.xpose.msra.mxu0 0.0
        %702 = vmatprep.subr.mxu0 0.0
        %703 = vmatpush1.xpose.msra.mxu0 0.0
        %704 = vmatprep.subr.mxu0 0.0
        %705 = vmatpush1.xpose.msra.mxu0 0.0
        %706 = vmatprep.subr.mxu0 0.0
        %707 = vmatpush1.xpose.msra.mxu0 0.0
        %708 = vmatprep.subr.mxu0 0.0
        %709 = vmatpush1.xpose.msra.mxu0 0.0
        %710 = vmatprep.subr.mxu0 0.0
        %711 = vmatpush1.xpose.msra.mxu0 0.0
        %712 = vmatprep.subr.mxu0 0.0
        %713 = vmatpush1.xpose.msra.mxu0 0.0
        %714 = vmatprep.subr.mxu0 0.0
        %715 = vmatpush1.xpose.msra.mxu0 0.0
        %716 = vmatprep.subr.mxu0 0.0
        %717 = vmatpush1.xpose.msra.mxu0 0.0
        %718 = vmatprep.subr.mxu0 0.0
        %719 = vmatpush1.xpose.msra.mxu0 0.0
        %720 = vmatprep.subr.mxu0 0.0
        %721 = vmatpush1.xpose.msra.mxu0 0.0
        %722 = vmatprep.subr.mxu0 0.0
        %723 = vmatpush1.xpose.msra.mxu0 0.0
        %724 = vmatprep.subr.mxu0 0.0
        %725 = vmatpush1.xpose.msra.mxu0 0.0
        %726 = vmatprep.subr.mxu0 0.0
        %727 = vmatpush1.xpose.msra.mxu0 0.0
        %728 = vmatprep.subr.mxu0 0.0
        %729 = vmatpush1.xpose.msra.mxu0 0.0
        %730 = vmatprep.subr.mxu0 0.0
        %731 = vmatpush1.xpose.msra.mxu0 0.0
        %732 = vmatprep.subr.mxu0 0.0
        %733 = vmatpush1.xpose.msra.mxu0 0.0
        %734 = vmatprep.subr.mxu0 0.0
        %735 = vmatpush1.xpose.msra.mxu0 0.0
        %736 = vmatprep.subr.mxu0 0.0
        %737 = vmatpush1.xpose.msra.mxu0 0.0
        %738 = vmatprep.subr.mxu0 0.0
        %739 = vmatpush1.xpose.msra.mxu0 0.0
        %740 = vmatprep.subr.mxu0 0.0
        %741 = vmatpush1.xpose.msra.mxu0 0.0
        %742 = vmatprep.subr.mxu0 0.0
        %743 = vmatpush1.xpose.msra.mxu0 0.0
        %744 = vmatprep.subr.mxu0 0.0
        %745 = vmatpush1.xpose.msra.mxu0 0.0
        %746 = vmatprep.subr.mxu0 0.0
        %747 = vmatpush1.xpose.msra.mxu0 0.0
        %748 = vmatprep.subr.mxu0 0.0
        %749 = vmatpush1.xpose.msra.mxu0 0.0
        %750 = vmatprep.subr.mxu0 0.0
        %751 = vmatpush1.xpose.msra.mxu0 0.0
        %752 = vmatprep.subr.mxu0 0.0
        %753 = vmatpush1.xpose.msra.mxu0 0.0
        %754 = vmatprep.subr.mxu0 0.0
        %755 = vmatpush1.xpose.msra.mxu0 0.0
        %756 = vmatprep.mubr.f32.mxu0 0.0
        %757 = vmatmul.mubr.f32.gmra.mrb[0].mxu0 %v687
        %v758 = vpop.f32.mrb[0].mxu0
        %v759 = vadd.f32 0.0, %v758
        %v760 = vpop.f32.mrb[0].mxu0
        %761 = vdwg.mxu0
        %v763 = vsel %vm396, %v481, 0
        %v766 = vsel %vm396, %v577, 0
        %768 = vmatprep.subr.mxu0 0.0
        %769 = vmatpush1.xpose.msra.mxu0 %v766
        %770 = vmatprep.subr.mxu0 0.0
        %771 = vmatpush1.xpose.msra.mxu0 0.0
        %772 = vmatprep.subr.mxu0 0.0
        %773 = vmatpush1.xpose.msra.mxu0 0.0
        %774 = vmatprep.subr.mxu0 0.0
        %775 = vmatpush1.xpose.msra.mxu0 0.0
        %776 = vmatprep.subr.mxu0 0.0
        %777 = vmatpush1.xpose.msra.mxu0 0.0
        %778 = vmatprep.subr.mxu0 0.0
        %779 = vmatpush1.xpose.msra.mxu0 0.0
        %780 = vmatprep.subr.mxu0 0.0
        %781 = vmatpush1.xpose.msra.mxu0 0.0
        %782 = vmatprep.subr.mxu0 0.0
        %783 = vmatpush1.xpose.msra.mxu0 0.0
        %784 = vmatprep.subr.mxu0 0.0
        %785 = vmatpush1.xpose.msra.mxu0 0.0
        %786 = vmatprep.subr.mxu0 0.0
        %787 = vmatpush1.xpose.msra.mxu0 0.0
        %788 = vmatprep.subr.mxu0 0.0
        %789 = vmatpush1.xpose.msra.mxu0 0.0
        %790 = vmatprep.subr.mxu0 0.0
        %791 = vmatpush1.xpose.msra.mxu0 0.0
        %792 = vmatprep.subr.mxu0 0.0
        %793 = vmatpush1.xpose.msra.mxu0 0.0
        %794 = vmatprep.subr.mxu0 0.0
        %795 = vmatpush1.xpose.msra.mxu0 0.0
        %796 = vmatprep.subr.mxu0 0.0
        %797 = vmatpush1.xpose.msra.mxu0 0.0
        %798 = vmatprep.subr.mxu0 0.0
        %799 = vmatpush1.xpose.msra.mxu0 0.0
        %800 = vmatprep.subr.mxu0 0.0
        %801 = vmatpush1.xpose.msra.mxu0 0.0
        %802 = vmatprep.subr.mxu0 0.0
        %803 = vmatpush1.xpose.msra.mxu0 0.0
        %804 = vmatprep.subr.mxu0 0.0
        %805 = vmatpush1.xpose.msra.mxu0 0.0
        %806 = vmatprep.subr.mxu0 0.0
        %807 = vmatpush1.xpose.msra.mxu0 0.0
        %808 = vmatprep.subr.mxu0 0.0
        %809 = vmatpush1.xpose.msra.mxu0 0.0
        %810 = vmatprep.subr.mxu0 0.0
        %811 = vmatpush1.xpose.msra.mxu0 0.0
        %812 = vmatprep.subr.mxu0 0.0
        %813 = vmatpush1.xpose.msra.mxu0 0.0
        %814 = vmatprep.subr.mxu0 0.0
        %815 = vmatpush1.xpose.msra.mxu0 0.0
        %816 = vmatprep.subr.mxu0 0.0
        %817 = vmatpush1.xpose.msra.mxu0 0.0
        %818 = vmatprep.subr.mxu0 0.0
        %819 = vmatpush1.xpose.msra.mxu0 0.0
        %820 = vmatprep.subr.mxu0 0.0
        %821 = vmatpush1.xpose.msra.mxu0 0.0
        %822 = vmatprep.subr.mxu0 0.0
        %823 = vmatpush1.xpose.msra.mxu0 0.0
        %824 = vmatprep.subr.mxu0 0.0
        %825 = vmatpush1.xpose.msra.mxu0 0.0
        %826 = vmatprep.subr.mxu0 0.0
        %827 = vmatpush1.xpose.msra.mxu0 0.0
        %828 = vmatprep.subr.mxu0 0.0
        %829 = vmatpush1.xpose.msra.mxu0 0.0
        %830 = vmatprep.subr.mxu0 0.0
        %831 = vmatpush1.xpose.msra.mxu0 0.0
        %832 = vmatprep.mubr.f32.mxu0 0.0
        %833 = vmatmul.mubr.f32.gmra.mrb[0].mxu0 %v763
        %v834 = vpop.f32.mrb[0].mxu0
        %v835 = vadd.f32 0.0, %v834
        %v836 = vpop.f32.mrb[0].mxu0
        %837 = vdwg.mxu0
        %v839 = vsel %vm396, %v486, 0
        %v842 = vsel %vm396, %v582, 0
        %844 = vmatprep.subr.mxu0 0.0
        %845 = vmatpush1.xpose.msra.mxu0 %v842
        %846 = vmatprep.subr.mxu0 0.0
        %847 = vmatpush1.xpose.msra.mxu0 0.0
        %848 = vmatprep.subr.mxu0 0.0
        %849 = vmatpush1.xpose.msra.mxu0 0.0
        %850 = vmatprep.subr.mxu0 0.0
        %851 = vmatpush1.xpose.msra.mxu0 0.0
        %852 = vmatprep.subr.mxu0 0.0
        %853 = vmatpush1.xpose.msra.mxu0 0.0
        %854 = vmatprep.subr.mxu0 0.0
        %855 = vmatpush1.xpose.msra.mxu0 0.0
        %856 = vmatprep.subr.mxu0 0.0
        %857 = vmatpush1.xpose.msra.mxu0 0.0
        %858 = vmatprep.subr.mxu0 0.0
        %859 = vmatpush1.xpose.msra.mxu0 0.0
        %860 = vmatprep.subr.mxu0 0.0
        %861 = vmatpush1.xpose.msra.mxu0 0.0
        %862 = vmatprep.subr.mxu0 0.0
        %863 = vmatpush1.xpose.msra.mxu0 0.0
        %864 = vmatprep.subr.mxu0 0.0
        %865 = vmatpush1.xpose.msra.mxu0 0.0
        %866 = vmatprep.subr.mxu0 0.0
        %867 = vmatpush1.xpose.msra.mxu0 0.0
        %868 = vmatprep.subr.mxu0 0.0
        %869 = vmatpush1.xpose.msra.mxu0 0.0
        %870 = vmatprep.subr.mxu0 0.0
        %871 = vmatpush1.xpose.msra.mxu0 0.0
        %872 = vmatprep.subr.mxu0 0.0
        %873 = vmatpush1.xpose.msra.mxu0 0.0
        %874 = vmatprep.subr.mxu0 0.0
        %875 = vmatpush1.xpose.msra.mxu0 0.0
        %876 = vmatprep.subr.mxu0 0.0
        %877 = vmatpush1.xpose.msra.mxu0 0.0
        %878 = vmatprep.subr.mxu0 0.0
        %879 = vmatpush1.xpose.msra.mxu0 0.0
        %880 = vmatprep.subr.mxu0 0.0
        %881 = vmatpush1.xpose.msra.mxu0 0.0
        %882 = vmatprep.subr.mxu0 0.0
        %883 = vmatpush1.xpose.msra.mxu0 0.0
        %884 = vmatprep.subr.mxu0 0.0
        %885 = vmatpush1.xpose.msra.mxu0 0.0
        %886 = vmatprep.subr.mxu0 0.0
        %887 = vmatpush1.xpose.msra.mxu0 0.0
        %888 = vmatprep.subr.mxu0 0.0
        %889 = vmatpush1.xpose.msra.mxu0 0.0
        %890 = vmatprep.subr.mxu0 0.0
        %891 = vmatpush1.xpose.msra.mxu0 0.0
        %892 = vmatprep.subr.mxu0 0.0
        %893 = vmatpush1.xpose.msra.mxu0 0.0
        %894 = vmatprep.subr.mxu0 0.0
        %895 = vmatpush1.xpose.msra.mxu0 0.0
        %896 = vmatprep.subr.mxu0 0.0
        %897 = vmatpush1.xpose.msra.mxu0 0.0
        %898 = vmatprep.subr.mxu0 0.0
        %899 = vmatpush1.xpose.msra.mxu0 0.0
        %900 = vmatprep.subr.mxu0 0.0
        %901 = vmatpush1.xpose.msra.mxu0 0.0
        %902 = vmatprep.subr.mxu0 0.0
        %903 = vmatpush1.xpose.msra.mxu0 0.0
        %904 = vmatprep.subr.mxu0 0.0
        %905 = vmatpush1.xpose.msra.mxu0 0.0
        %906 = vmatprep.subr.mxu0 0.0
        %907 = vmatpush1.xpose.msra.mxu0 0.0
        %908 = vmatprep.mubr.f32.mxu0 0.0
        %909 = vmatmul.mubr.f32.gmra.mrb[0].mxu0 %v839
        %v910 = vpop.f32.mrb[0].mxu0
        %v911 = vadd.f32 0.0, %v910
        %v912 = vpop.f32.mrb[0].mxu0
        %913 = vdwg.mxu0
        %v915 = vsel %vm396, %v491, 0
        %v918 = vsel %vm396, %v587, 0
        %920 = vmatprep.subr.mxu0 0.0
        %921 = vmatpush1.xpose.msra.mxu0 %v918
        %922 = vmatprep.subr.mxu0 0.0
        %923 = vmatpush1.xpose.msra.mxu0 0.0
        %924 = vmatprep.subr.mxu0 0.0
        %925 = vmatpush1.xpose.msra.mxu0 0.0
        %926 = vmatprep.subr.mxu0 0.0
        %927 = vmatpush1.xpose.msra.mxu0 0.0
        %928 = vmatprep.subr.mxu0 0.0
        %929 = vmatpush1.xpose.msra.mxu0 0.0
        %930 = vmatprep.subr.mxu0 0.0
        %931 = vmatpush1.xpose.msra.mxu0 0.0
        %932 = vmatprep.subr.mxu0 0.0
        %933 = vmatpush1.xpose.msra.mxu0 0.0
        %934 = vmatprep.subr.mxu0 0.0
        %935 = vmatpush1.xpose.msra.mxu0 0.0
        %936 = vmatprep.subr.mxu0 0.0
        %937 = vmatpush1.xpose.msra.mxu0 0.0
        %938 = vmatprep.subr.mxu0 0.0
        %939 = vmatpush1.xpose.msra.mxu0 0.0
        %940 = vmatprep.subr.mxu0 0.0
        %941 = vmatpush1.xpose.msra.mxu0 0.0
        %942 = vmatprep.subr.mxu0 0.0
        %943 = vmatpush1.xpose.msra.mxu0 0.0
        %944 = vmatprep.subr.mxu0 0.0
        %945 = vmatpush1.xpose.msra.mxu0 0.0
        %946 = vmatprep.subr.mxu0 0.0
        %947 = vmatpush1.xpose.msra.mxu0 0.0
        %948 = vmatprep.subr.mxu0 0.0
        %949 = vmatpush1.xpose.msra.mxu0 0.0
        %950 = vmatprep.subr.mxu0 0.0
        %951 = vmatpush1.xpose.msra.mxu0 0.0
        %952 = vmatprep.subr.mxu0 0.0
        %953 = vmatpush1.xpose.msra.mxu0 0.0
        %954 = vmatprep.subr.mxu0 0.0
        %955 = vmatpush1.xpose.msra.mxu0 0.0
        %956 = vmatprep.subr.mxu0 0.0
        %957 = vmatpush1.xpose.msra.mxu0 0.0
        %958 = vmatprep.subr.mxu0 0.0
        %959 = vmatpush1.xpose.msra.mxu0 0.0
        %960 = vmatprep.subr.mxu0 0.0
        %961 = vmatpush1.xpose.msra.mxu0 0.0
        %962 = vmatprep.subr.mxu0 0.0
        %963 = vmatpush1.xpose.msra.mxu0 0.0
        %964 = vmatprep.subr.mxu0 0.0
        %965 = vmatpush1.xpose.msra.mxu0 0.0
        %966 = vmatprep.subr.mxu0 0.0
        %967 = vmatpush1.xpose.msra.mxu0 0.0
        %968 = vmatprep.subr.mxu0 0.0
        %969 = vmatpush1.xpose.msra.mxu0 0.0
        %970 = vmatprep.subr.mxu0 0.0
        %971 = vmatpush1.xpose.msra.mxu0 0.0
        %972 = vmatprep.subr.mxu0 0.0
        %973 = vmatpush1.xpose.msra.mxu0 0.0
        %974 = vmatprep.subr.mxu0 0.0
        %975 = vmatpush1.xpose.msra.mxu0 0.0
        %976 = vmatprep.subr.mxu0 0.0
        %977 = vmatpush1.xpose.msra.mxu0 0.0
        %978 = vmatprep.subr.mxu0 0.0
        %979 = vmatpush1.xpose.msra.mxu0 0.0
        %980 = vmatprep.subr.mxu0 0.0
        %981 = vmatpush1.xpose.msra.mxu0 0.0
        %982 = vmatprep.subr.mxu0 0.0
        %983 = vmatpush1.xpose.msra.mxu0 0.0
        %984 = vmatprep.mubr.f32.mxu0 0.0
        %985 = vmatmul.mubr.f32.gmra.mrb[0].mxu0 %v915
        %v986 = vpop.f32.mrb[0].mxu0
        %v987 = vadd.f32 0.0, %v986
        %v988 = vpop.f32.mrb[0].mxu0
        %989 = vdwg.mxu0
        %v990 = vmul.f32 %v759, 0.17677669
        %v991 = vmul.f32 %v835, 0.17677669
        %v992 = vmul.f32 %v911, 0.17677669
        %v993 = vmul.f32 %v987, 0.17677669
        %vm994 = vcmask 64512
        %v995 = vsel %vm994, %v990, -inf
        %996 = vmax.xlane.f32.xlu0 %v995
        %v997 = vpop.xlane.xlu0 %996
        %v998 = vsel %vm994, %v991, -inf
        %999 = vmax.xlane.f32.xlu0 %v998
        %v1000 = vpop.xlane.xlu0 %999
        %v1001 = vsel %vm994, %v992, -inf
        %1002 = vmax.xlane.f32.xlu0 %v1001
        %v1003 = vpop.xlane.xlu0 %1002
        %v1004 = vsel %vm994, %v993, -inf
        %1005 = vmax.xlane.f32.xlu0 %v1004
        %v1006 = vpop.xlane.xlu0 %1005
        %v1007 = vsub.f32 %v990, %v997
        %v1008 = vsub.f32 %v991, %v1000
        %v1009 = vsub.f32 %v992, %v1003
        %v1010 = vsub.f32 %v993, %v1006
        %v1011 = vmul.f32 %v1007, 1.442695
        %v1012 = vpow.pop %v1011
        %v1013 = vmul.f32 %v1008, 1.442695
        %v1014 = vpow.pop %v1013
        %v1015 = vmul.f32 %v1009, 1.442695
        %v1016 = vpow.pop %v1015
        %v1017 = vmul.f32 %v1010, 1.442695
        %v1018 = vpow.pop %v1017
        %v1019 = vsel %vm994, %v1012, 0.0
        %1020 = vadd.xlane.f32.xlu0 %v1019
        %v1021 = vpop.xlane.xlu0 %1020
        %v1022 = vsel %vm994, %v1014, 0.0
        %1023 = vadd.xlane.f32.xlu0 %v1022
        %v1024 = vpop.xlane.xlu0 %1023
        %v1025 = vsel %vm994, %v1016, 0.0
        %1026 = vadd.xlane.f32.xlu0 %v1025
        %v1027 = vpop.xlane.xlu0 %1026
        %v1028 = vsel %vm994, %v1018, 0.0
        %1029 = vadd.xlane.f32.xlu0 %v1028
        %v1030 = vpop.xlane.xlu0 %1029
        %v1031 = vrcp.pop %v1021
        %v1032 = vrcp.pop %v1024
        %v1033 = vrcp.pop %v1027
        %v1034 = vrcp.pop %v1030
        %v1035 = vmul.f32 %v1012, %v1031
        %v1036 = vmul.f32 %v1014, %v1032
        %v1037 = vmul.f32 %v1016, %v1033
        %v1038 = vmul.f32 %v1018, %v1034
        %v1040 = vsel %vm994, %v1035, 0
        %1042 = vmatprep.subr.mxu0 0.0
        %1043 = vmatpush1.msra.mxu0 %v668
        %1044 = vmatprep.subr.mxu0 0.0
        %1045 = vmatpush1.msra.mxu0 0.0
        %1046 = vmatprep.subr.mxu0 0.0
        %1047 = vmatpush1.msra.mxu0 0.0
        %1048 = vmatprep.subr.mxu0 0.0
        %1049 = vmatpush1.msra.mxu0 0.0
        %1050 = vmatprep.subr.mxu0 0.0
        %1051 = vmatpush1.msra.mxu0 0.0
        %1052 = vmatprep.subr.mxu0 0.0
        %1053 = vmatpush1.msra.mxu0 0.0
        %1054 = vmatprep.subr.mxu0 0.0
        %1055 = vmatpush1.msra.mxu0 0.0
        %1056 = vmatprep.subr.mxu0 0.0
        %1057 = vmatpush1.msra.mxu0 0.0
        %1058 = vmatprep.subr.mxu0 0.0
        %1059 = vmatpush1.msra.mxu0 0.0
        %1060 = vmatprep.subr.mxu0 0.0
        %1061 = vmatpush1.msra.mxu0 0.0
        %1062 = vmatprep.subr.mxu0 0.0
        %1063 = vmatpush1.msra.mxu0 0.0
        %1064 = vmatprep.subr.mxu0 0.0
        %1065 = vmatpush1.msra.mxu0 0.0
        %1066 = vmatprep.subr.mxu0 0.0
        %1067 = vmatpush1.msra.mxu0 0.0
        %1068 = vmatprep.subr.mxu0 0.0
        %1069 = vmatpush1.msra.mxu0 0.0
        %1070 = vmatprep.subr.mxu0 0.0
        %1071 = vmatpush1.msra.mxu0 0.0
        %1072 = vmatprep.subr.mxu0 0.0
        %1073 = vmatpush1.msra.mxu0 0.0
        %1074 = vmatprep.subr.mxu0 0.0
        %1075 = vmatpush1.msra.mxu0 0.0
        %1076 = vmatprep.subr.mxu0 0.0
        %1077 = vmatpush1.msra.mxu0 0.0
        %1078 = vmatprep.subr.mxu0 0.0
        %1079 = vmatpush1.msra.mxu0 0.0
        %1080 = vmatprep.subr.mxu0 0.0
        %1081 = vmatpush1.msra.mxu0 0.0
        %1082 = vmatprep.subr.mxu0 0.0
        %1083 = vmatpush1.msra.mxu0 0.0
        %1084 = vmatprep.subr.mxu0 0.0
        %1085 = vmatpush1.msra.mxu0 0.0
        %1086 = vmatprep.subr.mxu0 0.0
        %1087 = vmatpush1.msra.mxu0 0.0
        %1088 = vmatprep.subr.mxu0 0.0
        %1089 = vmatpush1.msra.mxu0 0.0
        %1090 = vmatprep.subr.mxu0 0.0
        %1091 = vmatpush1.msra.mxu0 0.0
        %1092 = vmatprep.subr.mxu0 0.0
        %1093 = vmatpush1.msra.mxu0 0.0
        %1094 = vmatprep.subr.mxu0 0.0
        %1095 = vmatpush1.msra.mxu0 0.0
        %1096 = vmatprep.subr.mxu0 0.0
        %1097 = vmatpush1.msra.mxu0 0.0
        %1098 = vmatprep.subr.mxu0 0.0
        %1099 = vmatpush1.msra.mxu0 0.0
        %1100 = vmatprep.subr.mxu0 0.0
        %1101 = vmatpush1.msra.mxu0 0.0
        %1102 = vmatprep.subr.mxu0 0.0
        %1103 = vmatpush1.msra.mxu0 0.0
        %1104 = vmatprep.subr.mxu0 0.0
        %1105 = vmatpush1.msra.mxu0 0.0
        %1106 = vmatprep.mubr.f32.mxu0 0.0
        %1107 = vmatmul.mubr.f32.gmra.mrb[0].mxu0 %v1040
        %v1108 = vpop.f32.mrb[0].mxu0
        %v1109 = vadd.f32 0.0, %v1108
        %v1110 = vpop.f32.mrb[0].mxu0
        %1111 = vdwg.mxu0
        %v1113 = vsel %vm994, %v1036, 0
        %1115 = vmatprep.subr.mxu0 0.0
        %1116 = vmatpush1.msra.mxu0 %v673
        %1117 = vmatprep.subr.mxu0 0.0
        %1118 = vmatpush1.msra.mxu0 0.0
        %1119 = vmatprep.subr.mxu0 0.0
        %1120 = vmatpush1.msra.mxu0 0.0
        %1121 = vmatprep.subr.mxu0 0.0
        %1122 = vmatpush1.msra.mxu0 0.0
        %1123 = vmatprep.subr.mxu0 0.0
        %1124 = vmatpush1.msra.mxu0 0.0
        %1125 = vmatprep.subr.mxu0 0.0
        %1126 = vmatpush1.msra.mxu0 0.0
        %1127 = vmatprep.subr.mxu0 0.0
        %1128 = vmatpush1.msra.mxu0 0.0
        %1129 = vmatprep.subr.mxu0 0.0
        %1130 = vmatpush1.msra.mxu0 0.0
        %1131 = vmatprep.subr.mxu0 0.0
        %1132 = vmatpush1.msra.mxu0 0.0
        %1133 = vmatprep.subr.mxu0 0.0
        %1134 = vmatpush1.msra.mxu0 0.0
        %1135 = vmatprep.subr.mxu0 0.0
        %1136 = vmatpush1.msra.mxu0 0.0
        %1137 = vmatprep.subr.mxu0 0.0
        %1138 = vmatpush1.msra.mxu0 0.0
        %1139 = vmatprep.subr.mxu0 0.0
        %1140 = vmatpush1.msra.mxu0 0.0
        %1141 = vmatprep.subr.mxu0 0.0
        %1142 = vmatpush1.msra.mxu0 0.0
        %1143 = vmatprep.subr.mxu0 0.0
        %1144 = vmatpush1.msra.mxu0 0.0
        %1145 = vmatprep.subr.mxu0 0.0
        %1146 = vmatpush1.msra.mxu0 0.0
        %1147 = vmatprep.subr.mxu0 0.0
        %1148 = vmatpush1.msra.mxu0 0.0
        %1149 = vmatprep.subr.mxu0 0.0
        %1150 = vmatpush1.msra.mxu0 0.0
        %1151 = vmatprep.subr.mxu0 0.0
        %1152 = vmatpush1.msra.mxu0 0.0
        %1153 = vmatprep.subr.mxu0 0.0
        %1154 = vmatpush1.msra.mxu0 0.0
        %1155 = vmatprep.subr.mxu0 0.0
        %1156 = vmatpush1.msra.mxu0 0.0
        %1157 = vmatprep.subr.mxu0 0.0
        %1158 = vmatpush1.msra.mxu0 0.0
        %1159 = vmatprep.subr.mxu0 0.0
        %1160 = vmatpush1.msra.mxu0 0.0
        %1161 = vmatprep.subr.mxu0 0.0
        %1162 = vmatpush1.msra.mxu0 0.0
        %1163 = vmatprep.subr.mxu0 0.0
        %1164 = vmatpush1.msra.mxu0 0.0
        %1165 = vmatprep.subr.mxu0 0.0
        %1166 = vmatpush1.msra.mxu0 0.0
        %1167 = vmatprep.subr.mxu0 0.0
        %1168 = vmatpush1.msra.mxu0 0.0
        %1169 = vmatprep.subr.mxu0 0.0
        %1170 = vmatpush1.msra.mxu0 0.0
        %1171 = vmatprep.subr.mxu0 0.0
        %1172 = vmatpush1.msra.mxu0 0.0
        %1173 = vmatprep.subr.mxu0 0.0
        %1174 = vmatpush1.msra.mxu0 0.0
        %1175 = vmatprep.subr.mxu0 0.0
        %1176 = vmatpush1.msra.mxu0 0.0
        %1177 = vmatprep.subr.mxu0 0.0
        %1178 = vmatpush1.msra.mxu0 0.0
        %1179 = vmatprep.mubr.f32.mxu0 0.0
        %1180 = vmatmul.mubr.f32.gmra.mrb[0].mxu0 %v1113
        %v1181 = vpop.f32.mrb[0].mxu0
        %v1182 = vadd.f32 0.0, %v1181
        %v1183 = vpop.f32.mrb[0].mxu0
        %1184 = vdwg.mxu0
        %v1186 = vsel %vm994, %v1037, 0
        %1188 = vmatprep.subr.mxu0 0.0
        %1189 = vmatpush1.msra.mxu0 %v678
        %1190 = vmatprep.subr.mxu0 0.0
        %1191 = vmatpush1.msra.mxu0 0.0
        %1192 = vmatprep.subr.mxu0 0.0
        %1193 = vmatpush1.msra.mxu0 0.0
        %1194 = vmatprep.subr.mxu0 0.0
        %1195 = vmatpush1.msra.mxu0 0.0
        %1196 = vmatprep.subr.mxu0 0.0
        %1197 = vmatpush1.msra.mxu0 0.0
        %1198 = vmatprep.subr.mxu0 0.0
        %1199 = vmatpush1.msra.mxu0 0.0
        %1200 = vmatprep.subr.mxu0 0.0
        %1201 = vmatpush1.msra.mxu0 0.0
        %1202 = vmatprep.subr.mxu0 0.0
        %1203 = vmatpush1.msra.mxu0 0.0
        %1204 = vmatprep.subr.mxu0 0.0
        %1205 = vmatpush1.msra.mxu0 0.0
        %1206 = vmatprep.subr.mxu0 0.0
        %1207 = vmatpush1.msra.mxu0 0.0
        %1208 = vmatprep.subr.mxu0 0.0
        %1209 = vmatpush1.msra.mxu0 0.0
        %1210 = vmatprep.subr.mxu0 0.0
        %1211 = vmatpush1.msra.mxu0 0.0
        %1212 = vmatprep.subr.mxu0 0.0
        %1213 = vmatpush1.msra.mxu0 0.0
        %1214 = vmatprep.subr.mxu0 0.0
        %1215 = vmatpush1.msra.mxu0 0.0
        %1216 = vmatprep.subr.mxu0 0.0
        %1217 = vmatpush1.msra.mxu0 0.0
        %1218 = vmatprep.subr.mxu0 0.0
        %1219 = vmatpush1.msra.mxu0 0.0
        %1220 = vmatprep.subr.mxu0 0.0
        %1221 = vmatpush1.msra.mxu0 0.0
        %1222 = vmatprep.subr.mxu0 0.0
        %1223 = vmatpush1.msra.mxu0 0.0
        %1224 = vmatprep.subr.mxu0 0.0
        %1225 = vmatpush1.msra.mxu0 0.0
        %1226 = vmatprep.subr.mxu0 0.0
        %1227 = vmatpush1.msra.mxu0 0.0
        %1228 = vmatprep.subr.mxu0 0.0
        %1229 = vmatpush1.msra.mxu0 0.0
        %1230 = vmatprep.subr.mxu0 0.0
        %1231 = vmatpush1.msra.mxu0 0.0
        %1232 = vmatprep.subr.mxu0 0.0
        %1233 = vmatpush1.msra.mxu0 0.0
        %1234 = vmatprep.subr.mxu0 0.0
        %1235 = vmatpush1.msra.mxu0 0.0
        %1236 = vmatprep.subr.mxu0 0.0
        %1237 = vmatpush1.msra.mxu0 0.0
        %1238 = vmatprep.subr.mxu0 0.0
        %1239 = vmatpush1.msra.mxu0 0.0
        %1240 = vmatprep.subr.mxu0 0.0
        %1241 = vmatpush1.msra.mxu0 0.0
        %1242 = vmatprep.subr.mxu0 0.0
        %1243 = vmatpush1.msra.mxu0 0.0
        %1244 = vmatprep.subr.mxu0 0.0
        %1245 = vmatpush1.msra.mxu0 0.0
        %1246 = vmatprep.subr.mxu0 0.0
        %1247 = vmatpush1.msra.mxu0 0.0
        %1248 = vmatprep.subr.mxu0 0.0
        %1249 = vmatpush1.msra.mxu0 0.0
        %1250 = vmatprep.subr.mxu0 0.0
        %1251 = vmatpush1.msra.mxu0 0.0
        %1252 = vmatprep.mubr.f32.mxu0 0.0
        %1253 = vmatmul.mubr.f32.gmra.mrb[0].mxu0 %v1186
        %v1254 = vpop.f32.mrb[0].mxu0
        %v1255 = vadd.f32 0.0, %v1254
        %v1256 = vpop.f32.mrb[0].mxu0
        %1257 = vdwg.mxu0
        %v1259 = vsel %vm994, %v1038, 0
        %1261 = vmatprep.subr.mxu0 0.0
        %1262 = vmatpush1.msra.mxu0 %v683
        %1263 = vmatprep.subr.mxu0 0.0
        %1264 = vmatpush1.msra.mxu0 0.0
        %1265 = vmatprep.subr.mxu0 0.0
        %1266 = vmatpush1.msra.mxu0 0.0
        %1267 = vmatprep.subr.mxu0 0.0
        %1268 = vmatpush1.msra.mxu0 0.0
        %1269 = vmatprep.subr.mxu0 0.0
        %1270 = vmatpush1.msra.mxu0 0.0
        %1271 = vmatprep.subr.mxu0 0.0
        %1272 = vmatpush1.msra.mxu0 0.0
        %1273 = vmatprep.subr.mxu0 0.0
        %1274 = vmatpush1.msra.mxu0 0.0
        %1275 = vmatprep.subr.mxu0 0.0
        %1276 = vmatpush1.msra.mxu0 0.0
        %1277 = vmatprep.subr.mxu0 0.0
        %1278 = vmatpush1.msra.mxu0 0.0
        %1279 = vmatprep.subr.mxu0 0.0
        %1280 = vmatpush1.msra.mxu0 0.0
        %1281 = vmatprep.subr.mxu0 0.0
        %1282 = vmatpush1.msra.mxu0 0.0
        %1283 = vmatprep.subr.mxu0 0.0
        %1284 = vmatpush1.msra.mxu0 0.0
        %1285 = vmatprep.subr.mxu0 0.0
        %1286 = vmatpush1.msra.mxu0 0.0
        %1287 = vmatprep.subr.mxu0 0.0
        %1288 = vmatpush1.msra.mxu0 0.0
        %1289 = vmatprep.subr.mxu0 0.0
        %1290 = vmatpush1.msra.mxu0 0.0
        %1291 = vmatprep.subr.mxu0 0.0
        %1292 = vmatpush1.msra.mxu0 0.0
        %1293 = vmatprep.subr.mxu0 0.0
        %1294 = vmatpush1.msra.mxu0 0.0
        %1295 = vmatprep.subr.mxu0 0.0
        %1296 = vmatpush1.msra.mxu0 0.0
        %1297 = vmatprep.subr.mxu0 0.0
        %1298 = vmatpush1.msra.mxu0 0.0
        %1299 = vmatprep.subr.mxu0 0.0
        %1300 = vmatpush1.msra.mxu0 0.0
        %1301 = vmatprep.subr.mxu0 0.0
        %1302 = vmatpush1.msra.mxu0 0.0
        %1303 = vmatprep.subr.mxu0 0.0
        %1304 = vmatpush1.msra.mxu0 0.0
        %1305 = vmatprep.subr.mxu0 0.0
        %1306 = vmatpush1.msra.mxu0 0.0
        %1307 = vmatprep.subr.mxu0 0.0
        %1308 = vmatpush1.msra.mxu0 0.0
        %1309 = vmatprep.subr.mxu0 0.0
        %1310 = vmatpush1.msra.mxu0 0.0
        %1311 = vmatprep.subr.mxu0 0.0
        %1312 = vmatpush1.msra.mxu0 0.0
        %1313 = vmatprep.subr.mxu0 0.0
        %1314 = vmatpush1.msra.mxu0 0.0
        %1315 = vmatprep.subr.mxu0 0.0
        %1316 = vmatpush1.msra.mxu0 0.0
        %1317 = vmatprep.subr.mxu0 0.0
        %1318 = vmatpush1.msra.mxu0 0.0
        %1319 = vmatprep.subr.mxu0 0.0
        %1320 = vmatpush1.msra.mxu0 0.0
        %1321 = vmatprep.subr.mxu0 0.0
        %1322 = vmatpush1.msra.mxu0 0.0
        %1323 = vmatprep.subr.mxu0 0.0
        %1324 = vmatpush1.msra.mxu0 0.0
        %1325 = vmatprep.mubr.f32.mxu0 0.0
        %1326 = vmatmul.mubr.f32.gmra.mrb[0].mxu0 %v1259
        %v1327 = vpop.f32.mrb[0].mxu0
        %v1328 = vadd.f32 0.0, %v1327
        %v1329 = vpop.f32.mrb[0].mxu0
        %1330 = vdwg.mxu0
        %1331 = vst.msk [vmem:[%s371] sm:$0xff] %vm396, %v1109
        %1332 = vst.msk [vmem:[%s371 + $0x8] sm:$0xff] %vm396, %v1182
        %1333 = vst.msk [vmem:[%s371 + $0x10] sm:$0xff] %vm396, %v1255
        %1334 = vst.msk [vmem:[%s371 + $0x18] sm:$0xff] %vm396, %v1328
        %1335 = vst.msk [vmem:[%s378] sm:$0xff] %vm994, %v1038
        %1336 = vrot.lane.b32.xlu0 %v476, 96
        %v1337 = vpop.permute.xlu0 %1336
        %1338 = vrot.lane.b32.xlu0 %v572, 96
        %v1339 = vpop.permute.xlu0 %1338
        %v1340 = vsel %vm396, %v1337, 0
        %v1342 = vsel %vm396, %v1339, 0
        %1344 = vmatprep.subr.mxu0 0.0
        %1345 = vmatpush1.xpose.msra.mxu0 %v1342
        %1346 = vmatprep.subr.mxu0 0.0
        %1347 = vmatpush1.xpose.msra.mxu0 0.0
        %1348 = vmatprep.subr.mxu0 0.0
        %1349 = vmatpush1.xpose.msra.mxu0 0.0
        %1350 = vmatprep.subr.mxu0 0.0
        %1351 = vmatpush1.xpose.msra.mxu0 0.0
        %1352 = vmatprep.subr.mxu0 0.0
        %1353 = vmatpush1.xpose.msra.mxu0 0.0
        %1354 = vmatprep.subr.mxu0 0.0
        %1355 = vmatpush1.xpose.msra.mxu0 0.0
        %1356 = vmatprep.subr.mxu0 0.0
        %1357 = vmatpush1.xpose.msra.mxu0 0.0
        %1358 = vmatprep.subr.mxu0 0.0
        %1359 = vmatpush1.xpose.msra.mxu0 0.0
        %1360 = vmatprep.subr.mxu0 0.0
        %1361 = vmatpush1.xpose.msra.mxu0 0.0
        %1362 = vmatprep.subr.mxu0 0.0
        %1363 = vmatpush1.xpose.msra.mxu0 0.0
        %1364 = vmatprep.subr.mxu0 0.0
        %1365 = vmatpush1.xpose.msra.mxu0 0.0
        %1366 = vmatprep.subr.mxu0 0.0
        %1367 = vmatpush1.xpose.msra.mxu0 0.0
        %1368 = vmatprep.subr.mxu0 0.0
        %1369 = vmatpush1.xpose.msra.mxu0 0.0
        %1370 = vmatprep.subr.mxu0 0.0
        %1371 = vmatpush1.xpose.msra.mxu0 0.0
        %1372 = vmatprep.subr.mxu0 0.0
        %1373 = vmatpush1.xpose.msra.mxu0 0.0
        %1374 = vmatprep.subr.mxu0 0.0
        %1375 = vmatpush1.xpose.msra.mxu0 0.0
        %1376 = vmatprep.subr.mxu0 0.0
        %1377 = vmatpush1.xpose.msra.mxu0 0.0
        %1378 = vmatprep.subr.mxu0 0.0
        %1379 = vmatpush1.xpose.msra.mxu0 0.0
        %1380 = vmatprep.subr.mxu0 0.0
        %1381 = vmatpush1.xpose.msra.mxu0 0.0
        %1382 = vmatprep.subr.mxu0 0.0
        %1383 = vmatpush1.xpose.msra.mxu0 0.0
        %1384 = vmatprep.subr.mxu0 0.0
        %1385 = vmatpush1.xpose.msra.mxu0 0.0
        %1386 = vmatprep.subr.mxu0 0.0
        %1387 = vmatpush1.xpose.msra.mxu0 0.0
        %1388 = vmatprep.subr.mxu0 0.0
        %1389 = vmatpush1.xpose.msra.mxu0 0.0
        %1390 = vmatprep.subr.mxu0 0.0
        %1391 = vmatpush1.xpose.msra.mxu0 0.0
        %1392 = vmatprep.subr.mxu0 0.0
        %1393 = vmatpush1.xpose.msra.mxu0 0.0
        %1394 = vmatprep.subr.mxu0 0.0
        %1395 = vmatpush1.xpose.msra.mxu0 0.0
        %1396 = vmatprep.subr.mxu0 0.0
        %1397 = vmatpush1.xpose.msra.mxu0 0.0
        %1398 = vmatprep.subr.mxu0 0.0
        %1399 = vmatpush1.xpose.msra.mxu0 0.0
        %1400 = vmatprep.subr.mxu0 0.0
        %1401 = vmatpush1.xpose.msra.mxu0 0.0
        %1402 = vmatprep.subr.mxu0 0.0
        %1403 = vmatpush1.xpose.msra.mxu0 0.0
        %1404 = vmatprep.subr.mxu0 0.0
        %1405 = vmatpush1.xpose.msra.mxu0 0.0
        %1406 = vmatprep.subr.mxu0 0.0
        %1407 = vmatpush1.xpose.msra.mxu0 0.0
        %1408 = vmatprep.mubr.f32.mxu0 0.0
        %1409 = vmatmul.mubr.f32.gmra.mrb[0].mxu0 %v1340
        %v1410 = vpop.f32.mrb[0].mxu0
        %v1411 = vadd.f32 0.0, %v1410
        %v1412 = vpop.f32.mrb[0].mxu0
        %1413 = vdwg.mxu0
        %1414 = vrot.lane.b32.xlu0 %v481, 96
        %v1415 = vpop.permute.xlu0 %1414
        %1416 = vrot.lane.b32.xlu0 %v577, 96
        %v1417 = vpop.permute.xlu0 %1416
        %v1418 = vsel %vm396, %v1415, 0
        %v1420 = vsel %vm396, %v1417, 0
        %1422 = vmatprep.subr.mxu0 0.0
        %1423 = vmatpush1.xpose.msra.mxu0 %v1420
        %1424 = vmatprep.subr.mxu0 0.0
        %1425 = vmatpush1.xpose.msra.mxu0 0.0
        %1426 = vmatprep.subr.mxu0 0.0
        %1427 = vmatpush1.xpose.msra.mxu0 0.0
        %1428 = vmatprep.subr.mxu0 0.0
        %1429 = vmatpush1.xpose.msra.mxu0 0.0
        %1430 = vmatprep.subr.mxu0 0.0
        %1431 = vmatpush1.xpose.msra.mxu0 0.0
        %1432 = vmatprep.subr.mxu0 0.0
        %1433 = vmatpush1.xpose.msra.mxu0 0.0
        %1434 = vmatprep.subr.mxu0 0.0
        %1435 = vmatpush1.xpose.msra.mxu0 0.0
        %1436 = vmatprep.subr.mxu0 0.0
        %1437 = vmatpush1.xpose.msra.mxu0 0.0
        %1438 = vmatprep.subr.mxu0 0.0
        %1439 = vmatpush1.xpose.msra.mxu0 0.0
        %1440 = vmatprep.subr.mxu0 0.0
        %1441 = vmatpush1.xpose.msra.mxu0 0.0
        %1442 = vmatprep.subr.mxu0 0.0
        %1443 = vmatpush1.xpose.msra.mxu0 0.0
        %1444 = vmatprep.subr.mxu0 0.0
        %1445 = vmatpush1.xpose.msra.mxu0 0.0
        %1446 = vmatprep.subr.mxu0 0.0
        %1447 = vmatpush1.xpose.msra.mxu0 0.0
        %1448 = vmatprep.subr.mxu0 0.0
        %1449 = vmatpush1.xpose.msra.mxu0 0.0
        %1450 = vmatprep.subr.mxu0 0.0
        %1451 = vmatpush1.xpose.msra.mxu0 0.0
        %1452 = vmatprep.subr.mxu0 0.0
        %1453 = vmatpush1.xpose.msra.mxu0 0.0
        %1454 = vmatprep.subr.mxu0 0.0
        %1455 = vmatpush1.xpose.msra.mxu0 0.0
        %1456 = vmatprep.subr.mxu0 0.0
        %1457 = vmatpush1.xpose.msra.mxu0 0.0
        %1458 = vmatprep.subr.mxu0 0.0
        %1459 = vmatpush1.xpose.msra.mxu0 0.0
        %1460 = vmatprep.subr.mxu0 0.0
        %1461 = vmatpush1.xpose.msra.mxu0 0.0
        %1462 = vmatprep.subr.mxu0 0.0
        %1463 = vmatpush1.xpose.msra.mxu0 0.0
        %1464 = vmatprep.subr.mxu0 0.0
        %1465 = vmatpush1.xpose.msra.mxu0 0.0
        %1466 = vmatprep.subr.mxu0 0.0
        %1467 = vmatpush1.xpose.msra.mxu0 0.0
        %1468 = vmatprep.subr.mxu0 0.0
        %1469 = vmatpush1.xpose.msra.mxu0 0.0
        %1470 = vmatprep.subr.mxu0 0.0
        %1471 = vmatpush1.xpose.msra.mxu0 0.0
        %1472 = vmatprep.subr.mxu0 0.0
        %1473 = vmatpush1.xpose.msra.mxu0 0.0
        %1474 = vmatprep.subr.mxu0 0.0
        %1475 = vmatpush1.xpose.msra.mxu0 0.0
        %1476 = vmatprep.subr.mxu0 0.0
        %1477 = vmatpush1.xpose.msra.mxu0 0.0
        %1478 = vmatprep.subr.mxu0 0.0
        %1479 = vmatpush1.xpose.msra.mxu0 0.0
        %1480 = vmatprep.subr.mxu0 0.0
        %1481 = vmatpush1.xpose.msra.mxu0 0.0
        %1482 = vmatprep.subr.mxu0 0.0
        %1483 = vmatpush1.xpose.msra.mxu0 0.0
        %1484 = vmatprep.subr.mxu0 0.0
        %1485 = vmatpush1.xpose.msra.mxu0 0.0
        %1486 = vmatprep.mubr.f32.mxu0 0.0
        %1487 = vmatmul.mubr.f32.gmra.mrb[0].mxu0 %v1418
        %v1488 = vpop.f32.mrb[0].mxu0
        %v1489 = vadd.f32 0.0, %v1488
        %v1490 = vpop.f32.mrb[0].mxu0
        %1491 = vdwg.mxu0
        %1492 = vrot.lane.b32.xlu0 %v486, 96
        %v1493 = vpop.permute.xlu0 %1492
        %1494 = vrot.lane.b32.xlu0 %v582, 96
        %v1495 = vpop.permute.xlu0 %1494
        %v1496 = vsel %vm396, %v1493, 0
        %v1498 = vsel %vm396, %v1495, 0
        %1500 = vmatprep.subr.mxu0 0.0
        %1501 = vmatpush1.xpose.msra.mxu0 %v1498
        %1502 = vmatprep.subr.mxu0 0.0
        %1503 = vmatpush1.xpose.msra.mxu0 0.0
        %1504 = vmatprep.subr.mxu0 0.0
        %1505 = vmatpush1.xpose.msra.mxu0 0.0
        %1506 = vmatprep.subr.mxu0 0.0
        %1507 = vmatpush1.xpose.msra.mxu0 0.0
        %1508 = vmatprep.subr.mxu0 0.0
        %1509 = vmatpush1.xpose.msra.mxu0 0.0
        %1510 = vmatprep.subr.mxu0 0.0
        %1511 = vmatpush1.xpose.msra.mxu0 0.0
        %1512 = vmatprep.subr.mxu0 0.0
        %1513 = vmatpush1.xpose.msra.mxu0 0.0
        %1514 = vmatprep.subr.mxu0 0.0
        %1515 = vmatpush1.xpose.msra.mxu0 0.0
        %1516 = vmatprep.subr.mxu0 0.0
        %1517 = vmatpush1.xpose.msra.mxu0 0.0
        %1518 = vmatprep.subr.mxu0 0.0
        %1519 = vmatpush1.xpose.msra.mxu0 0.0
        %1520 = vmatprep.subr.mxu0 0.0
        %1521 = vmatpush1.xpose.msra.mxu0 0.0
        %1522 = vmatprep.subr.mxu0 0.0
        %1523 = vmatpush1.xpose.msra.mxu0 0.0
        %1524 = vmatprep.subr.mxu0 0.0
        %1525 = vmatpush1.xpose.msra.mxu0 0.0
        %1526 = vmatprep.subr.mxu0 0.0
        %1527 = vmatpush1.xpose.msra.mxu0 0.0
        %1528 = vmatprep.subr.mxu0 0.0
        %1529 = vmatpush1.xpose.msra.mxu0 0.0
        %1530 = vmatprep.subr.mxu0 0.0
        %1531 = vmatpush1.xpose.msra.mxu0 0.0
        %1532 = vmatprep.subr.mxu0 0.0
        %1533 = vmatpush1.xpose.msra.mxu0 0.0
        %1534 = vmatprep.subr.mxu0 0.0
        %1535 = vmatpush1.xpose.msra.mxu0 0.0
        %1536 = vmatprep.subr.mxu0 0.0
        %1537 = vmatpush1.xpose.msra.mxu0 0.0
        %1538 = vmatprep.subr.mxu0 0.0
        %1539 = vmatpush1.xpose.msra.mxu0 0.0
        %1540 = vmatprep.subr.mxu0 0.0
        %1541 = vmatpush1.xpose.msra.mxu0 0.0
        %1542 = vmatprep.subr.mxu0 0.0
        %1543 = vmatpush1.xpose.msra.mxu0 0.0
        %1544 = vmatprep.subr.mxu0 0.0
        %1545 = vmatpush1.xpose.msra.mxu0 0.0
        %1546 = vmatprep.subr.mxu0 0.0
        %1547 = vmatpush1.xpose.msra.mxu0 0.0
        %1548 = vmatprep.subr.mxu0 0.0
        %1549 = vmatpush1.xpose.msra.mxu0 0.0
        %1550 = vmatprep.subr.mxu0 0.0
        %1551 = vmatpush1.xpose.msra.mxu0 0.0
        %1552 = vmatprep.subr.mxu0 0.0
        %1553 = vmatpush1.xpose.msra.mxu0 0.0
        %1554 = vmatprep.subr.mxu0 0.0
        %1555 = vmatpush1.xpose.msra.mxu0 0.0
        %1556 = vmatprep.subr.mxu0 0.0
        %1557 = vmatpush1.xpose.msra.mxu0 0.0
        %1558 = vmatprep.subr.mxu0 0.0
        %1559 = vmatpush1.xpose.msra.mxu0 0.0
        %1560 = vmatprep.subr.mxu0 0.0
        %1561 = vmatpush1.xpose.msra.mxu0 0.0
        %1562 = vmatprep.subr.mxu0 0.0
        %1563 = vmatpush1.xpose.msra.mxu0 0.0
        %1564 = vmatprep.mubr.f32.mxu0 0.0
        %1565 = vmatmul.mubr.f32.gmra.mrb[0].mxu0 %v1496
        %v1566 = vpop.f32.mrb[0].mxu0
        %v1567 = vadd.f32 0.0, %v1566
        %v1568 = vpop.f32.mrb[0].mxu0
        %1569 = vdwg.mxu0
        %1570 = vrot.lane.b32.xlu0 %v491, 96
        %v1571 = vpop.permute.xlu0 %1570
        %1572 = vrot.lane.b32.xlu0 %v587, 96
        %v1573 = vpop.permute.xlu0 %1572
        %v1574 = vsel %vm396, %v1571, 0
        %v1576 = vsel %vm396, %v1573, 0
        %1578 = vmatprep.subr.mxu0 0.0
        %1579 = vmatpush1.xpose.msra.mxu0 %v1576
        %1580 = vmatprep.subr.mxu0 0.0
        %1581 = vmatpush1.xpose.msra.mxu0 0.0
        %1582 = vmatprep.subr.mxu0 0.0
        %1583 = vmatpush1.xpose.msra.mxu0 0.0
        %1584 = vmatprep.subr.mxu0 0.0
        %1585 = vmatpush1.xpose.msra.mxu0 0.0
        %1586 = vmatprep.subr.mxu0 0.0
        %1587 = vmatpush1.xpose.msra.mxu0 0.0
        %1588 = vmatprep.subr.mxu0 0.0
        %1589 = vmatpush1.xpose.msra.mxu0 0.0
        %1590 = vmatprep.subr.mxu0 0.0
        %1591 = vmatpush1.xpose.msra.mxu0 0.0
        %1592 = vmatprep.subr.mxu0 0.0
        %1593 = vmatpush1.xpose.msra.mxu0 0.0
        %1594 = vmatprep.subr.mxu0 0.0
        %1595 = vmatpush1.xpose.msra.mxu0 0.0
        %1596 = vmatprep.subr.mxu0 0.0
        %1597 = vmatpush1.xpose.msra.mxu0 0.0
        %1598 = vmatprep.subr.mxu0 0.0
        %1599 = vmatpush1.xpose.msra.mxu0 0.0
        %1600 = vmatprep.subr.mxu0 0.0
        %1601 = vmatpush1.xpose.msra.mxu0 0.0
        %1602 = vmatprep.subr.mxu0 0.0
        %1603 = vmatpush1.xpose.msra.mxu0 0.0
        %1604 = vmatprep.subr.mxu0 0.0
        %1605 = vmatpush1.xpose.msra.mxu0 0.0
        %1606 = vmatprep.subr.mxu0 0.0
        %1607 = vmatpush1.xpose.msra.mxu0 0.0
        %1608 = vmatprep.subr.mxu0 0.0
        %1609 = vmatpush1.xpose.msra.mxu0 0.0
        %1610 = vmatprep.subr.mxu0 0.0
        %1611 = vmatpush1.xpose.msra.mxu0 0.0
        %1612 = vmatprep.subr.mxu0 0.0
        %1613 = vmatpush1.xpose.msra.mxu0 0.0
        %1614 = vmatprep.subr.mxu0 0.0
        %1615 = vmatpush1.xpose.msra.mxu0 0.0
        %1616 = vmatprep.subr.mxu0 0.0
        %1617 = vmatpush1.xpose.msra.mxu0 0.0
        %1618 = vmatprep.subr.mxu0 0.0
        %1619 = vmatpush1.xpose.msra.mxu0 0.0
        %1620 = vmatprep.subr.mxu0 0.0
        %1621 = vmatpush1.xpose.msra.mxu0 0.0
        %1622 = vmatprep.subr.mxu0 0.0
        %1623 = vmatpush1.xpose.msra.mxu0 0.0
        %1624 = vmatprep.subr.mxu0 0.0
        %1625 = vmatpush1.xpose.msra.mxu0 0.0
        %1626 = vmatprep.subr.mxu0 0.0
        %1627 = vmatpush1.xpose.msra.mxu0 0.0
        %1628 = vmatprep.subr.mxu0 0.0
        %1629 = vmatpush1.xpose.msra.mxu0 0.0
        %1630 = vmatprep.subr.mxu0 0.0
        %1631 = vmatpush1.xpose.msra.mxu0 0.0
        %1632 = vmatprep.subr.mxu0 0.0
        %1633 = vmatpush1.xpose.msra.mxu0 0.0
        %1634 = vmatprep.subr.mxu0 0.0
        %1635 = vmatpush1.xpose.msra.mxu0 0.0
        %1636 = vmatprep.subr.mxu0 0.0
        %1637 = vmatpush1.xpose.msra.mxu0 0.0
        %1638 = vmatprep.subr.mxu0 0.0
        %1639 = vmatpush1.xpose.msra.mxu0 0.0
        %1640 = vmatprep.subr.mxu0 0.0
        %1641 = vmatpush1.xpose.msra.mxu0 0.0
        %1642 = vmatprep.mubr.f32.mxu0 0.0
        %1643 = vmatmul.mubr.f32.gmra.mrb[0].mxu0 %v1574
        %v1644 = vpop.f32.mrb[0].mxu0
        %v1645 = vadd.f32 0.0, %v1644
        %v1646 = vpop.f32.mrb[0].mxu0
        %1647 = vdwg.mxu0
        %v1648 = vmul.f32 %v1411, 0.17677669
        %v1649 = vmul.f32 %v1489, 0.17677669
        %v1650 = vmul.f32 %v1567, 0.17677669
        %v1651 = vmul.f32 %v1645, 0.17677669
        %v1652 = vsel %vm994, %v1648, -inf
        %1653 = vmax.xlane.f32.xlu0 %v1652
        %v1654 = vpop.xlane.xlu0 %1653
        %v1655 = vsel %vm994, %v1649, -inf
        %1656 = vmax.xlane.f32.xlu0 %v1655
        %v1657 = vpop.xlane.xlu0 %1656
        %v1658 = vsel %vm994, %v1650, -inf
        %1659 = vmax.xlane.f32.xlu0 %v1658
        %v1660 = vpop.xlane.xlu0 %1659
        %v1661 = vsel %vm994, %v1651, -inf
        %1662 = vmax.xlane.f32.xlu0 %v1661
        %v1663 = vpop.xlane.xlu0 %1662
        %v1664 = vsub.f32 %v1648, %v1654
        %v1665 = vsub.f32 %v1649, %v1657
        %v1666 = vsub.f32 %v1650, %v1660
        %v1667 = vsub.f32 %v1651, %v1663
        %v1668 = vmul.f32 %v1664, 1.442695
        %v1669 = vpow.pop %v1668
        %v1670 = vmul.f32 %v1665, 1.442695
        %v1671 = vpow.pop %v1670
        %v1672 = vmul.f32 %v1666, 1.442695
        %v1673 = vpow.pop %v1672
        %v1674 = vmul.f32 %v1667, 1.442695
        %v1675 = vpow.pop %v1674
        %v1676 = vsel %vm994, %v1669, 0.0
        %1677 = vadd.xlane.f32.xlu0 %v1676
        %v1678 = vpop.xlane.xlu0 %1677
        %v1679 = vsel %vm994, %v1671, 0.0
        %1680 = vadd.xlane.f32.xlu0 %v1679
        %v1681 = vpop.xlane.xlu0 %1680
        %v1682 = vsel %vm994, %v1673, 0.0
        %1683 = vadd.xlane.f32.xlu0 %v1682
        %v1684 = vpop.xlane.xlu0 %1683
        %v1685 = vsel %vm994, %v1675, 0.0
        %1686 = vadd.xlane.f32.xlu0 %v1685
        %v1687 = vpop.xlane.xlu0 %1686
        %v1688 = vrcp.pop %v1678
        %v1689 = vrcp.pop %v1681
        %v1690 = vrcp.pop %v1684
        %v1691 = vrcp.pop %v1687
        %v1692 = vmul.f32 %v1669, %v1688
        %v1693 = vmul.f32 %v1671, %v1689
        %v1694 = vmul.f32 %v1673, %v1690
        %v1695 = vmul.f32 %v1675, %v1691
        %1697 = vrot.lane.b32.xlu0 %v668, 96
        %v1698 = vpop.permute.xlu0 %1697
        %v1701 = vsel %vm994, %v1692, 0
        %1703 = vmatprep.subr.mxu0 0.0
        %1704 = vmatpush1.msra.mxu0 %v1698
        %1705 = vmatprep.subr.mxu0 0.0
        %1706 = vmatpush1.msra.mxu0 0.0
        %1707 = vmatprep.subr.mxu0 0.0
        %1708 = vmatpush1.msra.mxu0 0.0
        %1709 = vmatprep.subr.mxu0 0.0
        %1710 = vmatpush1.msra.mxu0 0.0
        %1711 = vmatprep.subr.mxu0 0.0
        %1712 = vmatpush1.msra.mxu0 0.0
        %1713 = vmatprep.subr.mxu0 0.0
        %1714 = vmatpush1.msra.mxu0 0.0
        %1715 = vmatprep.subr.mxu0 0.0
        %1716 = vmatpush1.msra.mxu0 0.0
        %1717 = vmatprep.subr.mxu0 0.0
        %1718 = vmatpush1.msra.mxu0 0.0
        %1719 = vmatprep.subr.mxu0 0.0
        %1720 = vmatpush1.msra.mxu0 0.0
        %1721 = vmatprep.subr.mxu0 0.0
        %1722 = vmatpush1.msra.mxu0 0.0
        %1723 = vmatprep.subr.mxu0 0.0
        %1724 = vmatpush1.msra.mxu0 0.0
        %1725 = vmatprep.subr.mxu0 0.0
        %1726 = vmatpush1.msra.mxu0 0.0
        %1727 = vmatprep.subr.mxu0 0.0
        %1728 = vmatpush1.msra.mxu0 0.0
        %1729 = vmatprep.subr.mxu0 0.0
        %1730 = vmatpush1.msra.mxu0 0.0
        %1731 = vmatprep.subr.mxu0 0.0
        %1732 = vmatpush1.msra.mxu0 0.0
        %1733 = vmatprep.subr.mxu0 0.0
        %1734 = vmatpush1.msra.mxu0 0.0
        %1735 = vmatprep.subr.mxu0 0.0
        %1736 = vmatpush1.msra.mxu0 0.0
        %1737 = vmatprep.subr.mxu0 0.0
        %1738 = vmatpush1.msra.mxu0 0.0
        %1739 = vmatprep.subr.mxu0 0.0
        %1740 = vmatpush1.msra.mxu0 0.0
        %1741 = vmatprep.subr.mxu0 0.0
        %1742 = vmatpush1.msra.mxu0 0.0
        %1743 = vmatprep.subr.mxu0 0.0
        %1744 = vmatpush1.msra.mxu0 0.0
        %1745 = vmatprep.subr.mxu0 0.0
        %1746 = vmatpush1.msra.mxu0 0.0
        %1747 = vmatprep.subr.mxu0 0.0
        %1748 = vmatpush1.msra.mxu0 0.0
        %1749 = vmatprep.subr.mxu0 0.0
        %1750 = vmatpush1.msra.mxu0 0.0
        %1751 = vmatprep.subr.mxu0 0.0
        %1752 = vmatpush1.msra.mxu0 0.0
        %1753 = vmatprep.subr.mxu0 0.0
        %1754 = vmatpush1.msra.mxu0 0.0
        %1755 = vmatprep.subr.mxu0 0.0
        %1756 = vmatpush1.msra.mxu0 0.0
        %1757 = vmatprep.subr.mxu0 0.0
        %1758 = vmatpush1.msra.mxu0 0.0
        %1759 = vmatprep.subr.mxu0 0.0
        %1760 = vmatpush1.msra.mxu0 0.0
        %1761 = vmatprep.subr.mxu0 0.0
        %1762 = vmatpush1.msra.mxu0 0.0
        %1763 = vmatprep.subr.mxu0 0.0
        %1764 = vmatpush1.msra.mxu0 0.0
        %1765 = vmatprep.subr.mxu0 0.0
        %1766 = vmatpush1.msra.mxu0 0.0
        %1767 = vmatprep.mubr.f32.mxu0 0.0
        %1768 = vmatmul.mubr.f32.gmra.mrb[0].mxu0 %v1701
        %v1769 = vpop.f32.mrb[0].mxu0
        %v1770 = vadd.f32 0.0, %v1769
        %v1771 = vpop.f32.mrb[0].mxu0
        %1772 = vdwg.mxu0
        %1774 = vrot.lane.b32.xlu0 %v673, 96
        %v1775 = vpop.permute.xlu0 %1774
        %v1778 = vsel %vm994, %v1693, 0
        %1780 = vmatprep.subr.mxu0 0.0
        %1781 = vmatpush1.msra.mxu0 %v1775
        %1782 = vmatprep.subr.mxu0 0.0
        %1783 = vmatpush1.msra.mxu0 0.0
        %1784 = vmatprep.subr.mxu0 0.0
        %1785 = vmatpush1.msra.mxu0 0.0
        %1786 = vmatprep.subr.mxu0 0.0
        %1787 = vmatpush1.msra.mxu0 0.0
        %1788 = vmatprep.subr.mxu0 0.0
        %1789 = vmatpush1.msra.mxu0 0.0
        %1790 = vmatprep.subr.mxu0 0.0
        %1791 = vmatpush1.msra.mxu0 0.0
        %1792 = vmatprep.subr.mxu0 0.0
        %1793 = vmatpush1.msra.mxu0 0.0
        %1794 = vmatprep.subr.mxu0 0.0
        %1795 = vmatpush1.msra.mxu0 0.0
        %1796 = vmatprep.subr.mxu0 0.0
        %1797 = vmatpush1.msra.mxu0 0.0
        %1798 = vmatprep.subr.mxu0 0.0
        %1799 = vmatpush1.msra.mxu0 0.0
        %1800 = vmatprep.subr.mxu0 0.0
        %1801 = vmatpush1.msra.mxu0 0.0
        %1802 = vmatprep.subr.mxu0 0.0
        %1803 = vmatpush1.msra.mxu0 0.0
        %1804 = vmatprep.subr.mxu0 0.0
        %1805 = vmatpush1.msra.mxu0 0.0
        %1806 = vmatprep.subr.mxu0 0.0
        %1807 = vmatpush1.msra.mxu0 0.0
        %1808 = vmatprep.subr.mxu0 0.0
        %1809 = vmatpush1.msra.mxu0 0.0
        %1810 = vmatprep.subr.mxu0 0.0
        %1811 = vmatpush1.msra.mxu0 0.0
        %1812 = vmatprep.subr.mxu0 0.0
        %1813 = vmatpush1.msra.mxu0 0.0
        %1814 = vmatprep.subr.mxu0 0.0
        %1815 = vmatpush1.msra.mxu0 0.0
        %1816 = vmatprep.subr.mxu0 0.0
        %1817 = vmatpush1.msra.mxu0 0.0
        %1818 = vmatprep.subr.mxu0 0.0
        %1819 = vmatpush1.msra.mxu0 0.0
        %1820 = vmatprep.subr.mxu0 0.0
        %1821 = vmatpush1.msra.mxu0 0.0
        %1822 = vmatprep.subr.mxu0 0.0
        %1823 = vmatpush1.msra.mxu0 0.0
        %1824 = vmatprep.subr.mxu0 0.0
        %1825 = vmatpush1.msra.mxu0 0.0
        %1826 = vmatprep.subr.mxu0 0.0
        %1827 = vmatpush1.msra.mxu0 0.0
        %1828 = vmatprep.subr.mxu0 0.0
        %1829 = vmatpush1.msra.mxu0 0.0
        %1830 = vmatprep.subr.mxu0 0.0
        %1831 = vmatpush1.msra.mxu0 0.0
        %1832 = vmatprep.subr.mxu0 0.0
        %1833 = vmatpush1.msra.mxu0 0.0
        %1834 = vmatprep.subr.mxu0 0.0
        %1835 = vmatpush1.msra.mxu0 0.0
        %1836 = vmatprep.subr.mxu0 0.0
        %1837 = vmatpush1.msra.mxu0 0.0
        %1838 = vmatprep.subr.mxu0 0.0
        %1839 = vmatpush1.msra.mxu0 0.0
        %1840 = vmatprep.subr.mxu0 0.0
        %1841 = vmatpush1.msra.mxu0 0.0
        %1842 = vmatprep.subr.mxu0 0.0
        %1843 = vmatpush1.msra.mxu0 0.0
        %1844 = vmatprep.mubr.f32.mxu0 0.0
        %1845 = vmatmul.mubr.f32.gmra.mrb[0].mxu0 %v1778
        %v1846 = vpop.f32.mrb[0].mxu0
        %v1847 = vadd.f32 0.0, %v1846
        %v1848 = vpop.f32.mrb[0].mxu0
        %1849 = vdwg.mxu0
        %1851 = vrot.lane.b32.xlu0 %v678, 96
        %v1852 = vpop.permute.xlu0 %1851
        %v1855 = vsel %vm994, %v1694, 0
        %1857 = vmatprep.subr.mxu0 0.0
        %1858 = vmatpush1.msra.mxu0 %v1852
        %1859 = vmatprep.subr.mxu0 0.0
        %1860 = vmatpush1.msra.mxu0 0.0
        %1861 = vmatprep.subr.mxu0 0.0
        %1862 = vmatpush1.msra.mxu0 0.0
        %1863 = vmatprep.subr.mxu0 0.0
        %1864 = vmatpush1.msra.mxu0 0.0
        %1865 = vmatprep.subr.mxu0 0.0
        %1866 = vmatpush1.msra.mxu0 0.0
        %1867 = vmatprep.subr.mxu0 0.0
        %1868 = vmatpush1.msra.mxu0 0.0
        %1869 = vmatprep.subr.mxu0 0.0
        %1870 = vmatpush1.msra.mxu0 0.0
        %1871 = vmatprep.subr.mxu0 0.0
        %1872 = vmatpush1.msra.mxu0 0.0
        %1873 = vmatprep.subr.mxu0 0.0
        %1874 = vmatpush1.msra.mxu0 0.0
        %1875 = vmatprep.subr.mxu0 0.0
        %1876 = vmatpush1.msra.mxu0 0.0
        %1877 = vmatprep.subr.mxu0 0.0
        %1878 = vmatpush1.msra.mxu0 0.0
        %1879 = vmatprep.subr.mxu0 0.0
        %1880 = vmatpush1.msra.mxu0 0.0
        %1881 = vmatprep.subr.mxu0 0.0
        %1882 = vmatpush1.msra.mxu0 0.0
        %1883 = vmatprep.subr.mxu0 0.0
        %1884 = vmatpush1.msra.mxu0 0.0
        %1885 = vmatprep.subr.mxu0 0.0
        %1886 = vmatpush1.msra.mxu0 0.0
        %1887 = vmatprep.subr.mxu0 0.0
        %1888 = vmatpush1.msra.mxu0 0.0
        %1889 = vmatprep.subr.mxu0 0.0
        %1890 = vmatpush1.msra.mxu0 0.0
        %1891 = vmatprep.subr.mxu0 0.0
        %1892 = vmatpush1.msra.mxu0 0.0
        %1893 = vmatprep.subr.mxu0 0.0
        %1894 = vmatpush1.msra.mxu0 0.0
        %1895 = vmatprep.subr.mxu0 0.0
        %1896 = vmatpush1.msra.mxu0 0.0
        %1897 = vmatprep.subr.mxu0 0.0
        %1898 = vmatpush1.msra.mxu0 0.0
        %1899 = vmatprep.subr.mxu0 0.0
        %1900 = vmatpush1.msra.mxu0 0.0
        %1901 = vmatprep.subr.mxu0 0.0
        %1902 = vmatpush1.msra.mxu0 0.0
        %1903 = vmatprep.subr.mxu0 0.0
        %1904 = vmatpush1.msra.mxu0 0.0
        %1905 = vmatprep.subr.mxu0 0.0
        %1906 = vmatpush1.msra.mxu0 0.0
        %1907 = vmatprep.subr.mxu0 0.0
        %1908 = vmatpush1.msra.mxu0 0.0
        %1909 = vmatprep.subr.mxu0 0.0
        %1910 = vmatpush1.msra.mxu0 0.0
        %1911 = vmatprep.subr.mxu0 0.0
        %1912 = vmatpush1.msra.mxu0 0.0
        %1913 = vmatprep.subr.mxu0 0.0
        %1914 = vmatpush1.msra.mxu0 0.0
        %1915 = vmatprep.subr.mxu0 0.0
        %1916 = vmatpush1.msra.mxu0 0.0
        %1917 = vmatprep.subr.mxu0 0.0
        %1918 = vmatpush1.msra.mxu0 0.0
        %1919 = vmatprep.subr.mxu0 0.0
        %1920 = vmatpush1.msra.mxu0 0.0
        %1921 = vmatprep.mubr.f32.mxu0 0.0
        %1922 = vmatmul.mubr.f32.gmra.mrb[0].mxu0 %v1855
        %v1923 = vpop.f32.mrb[0].mxu0
        %v1924 = vadd.f32 0.0, %v1923
        %v1925 = vpop.f32.mrb[0].mxu0
        %1926 = vdwg.mxu0
        %1928 = vrot.lane.b32.xlu0 %v683, 96
        %v1929 = vpop.permute.xlu0 %1928
        %v1932 = vsel %vm994, %v1695, 0
        %1934 = vmatprep.subr.mxu0 0.0
        %1935 = vmatpush1.msra.mxu0 %v1929
        %1936 = vmatprep.subr.mxu0 0.0
        %1937 = vmatpush1.msra.mxu0 0.0
        %1938 = vmatprep.subr.mxu0 0.0
        %1939 = vmatpush1.msra.mxu0 0.0
        %1940 = vmatprep.subr.mxu0 0.0
        %1941 = vmatpush1.msra.mxu0 0.0
        %1942 = vmatprep.subr.mxu0 0.0
        %1943 = vmatpush1.msra.mxu0 0.0
        %1944 = vmatprep.subr.mxu0 0.0
        %1945 = vmatpush1.msra.mxu0 0.0
        %1946 = vmatprep.subr.mxu0 0.0
        %1947 = vmatpush1.msra.mxu0 0.0
        %1948 = vmatprep.subr.mxu0 0.0
        %1949 = vmatpush1.msra.mxu0 0.0
        %1950 = vmatprep.subr.mxu0 0.0
        %1951 = vmatpush1.msra.mxu0 0.0
        %1952 = vmatprep.subr.mxu0 0.0
        %1953 = vmatpush1.msra.mxu0 0.0
        %1954 = vmatprep.subr.mxu0 0.0
        %1955 = vmatpush1.msra.mxu0 0.0
        %1956 = vmatprep.subr.mxu0 0.0
        %1957 = vmatpush1.msra.mxu0 0.0
        %1958 = vmatprep.subr.mxu0 0.0
        %1959 = vmatpush1.msra.mxu0 0.0
        %1960 = vmatprep.subr.mxu0 0.0
        %1961 = vmatpush1.msra.mxu0 0.0
        %1962 = vmatprep.subr.mxu0 0.0
        %1963 = vmatpush1.msra.mxu0 0.0
        %1964 = vmatprep.subr.mxu0 0.0
        %1965 = vmatpush1.msra.mxu0 0.0
        %1966 = vmatprep.subr.mxu0 0.0
        %1967 = vmatpush1.msra.mxu0 0.0
        %1968 = vmatprep.subr.mxu0 0.0
        %1969 = vmatpush1.msra.mxu0 0.0
        %1970 = vmatprep.subr.mxu0 0.0
        %1971 = vmatpush1.msra.mxu0 0.0
        %1972 = vmatprep.subr.mxu0 0.0
        %1973 = vmatpush1.msra.mxu0 0.0
        %1974 = vmatprep.subr.mxu0 0.0
        %1975 = vmatpush1.msra.mxu0 0.0
        %1976 = vmatprep.subr.mxu0 0.0
        %1977 = vmatpush1.msra.mxu0 0.0
        %1978 = vmatprep.subr.mxu0 0.0
        %1979 = vmatpush1.msra.mxu0 0.0
        %1980 = vmatprep.subr.mxu0 0.0
        %1981 = vmatpush1.msra.mxu0 0.0
        %1982 = vmatprep.subr.mxu0 0.0
        %1983 = vmatpush1.msra.mxu0 0.0
        %1984 = vmatprep.subr.mxu0 0.0
        %1985 = vmatpush1.msra.mxu0 0.0
        %1986 = vmatprep.subr.mxu0 0.0
        %1987 = vmatpush1.msra.mxu0 0.0
        %1988 = vmatprep.subr.mxu0 0.0
        %1989 = vmatpush1.msra.mxu0 0.0
        %1990 = vmatprep.subr.mxu0 0.0
        %1991 = vmatpush1.msra.mxu0 0.0
        %1992 = vmatprep.subr.mxu0 0.0
        %1993 = vmatpush1.msra.mxu0 0.0
        %1994 = vmatprep.subr.mxu0 0.0
        %1995 = vmatpush1.msra.mxu0 0.0
        %1996 = vmatprep.subr.mxu0 0.0
        %1997 = vmatpush1.msra.mxu0 0.0
        %1998 = vmatprep.mubr.f32.mxu0 0.0
        %1999 = vmatmul.mubr.f32.gmra.mrb[0].mxu0 %v1932
        %v2000 = vpop.f32.mrb[0].mxu0
        %v2001 = vadd.f32 0.0, %v2000
        %v2002 = vpop.f32.mrb[0].mxu0
        %2003 = vdwg.mxu0
        %2008 = vrot.lane.b32.xlu0 %v1770, 32
        %v2009 = vpop.permute.xlu0 %2008
        %2010 = vrot.lane.b32.xlu0 %v1847, 32
        %v2011 = vpop.permute.xlu0 %2010
        %2012 = vrot.lane.b32.xlu0 %v1924, 32
        %v2013 = vpop.permute.xlu0 %2012
        %2014 = vrot.lane.b32.xlu0 %v2001, 32
        %v2015 = vpop.permute.xlu0 %2014
        %vm2020 = vcmask 523520
        %2021 = vst.msk [vmem:[%s371] sm:$0xff] %vm2020, %v2009
        %2022 = vst.msk [vmem:[%s371 + $0x8] sm:$0xff] %vm2020, %v2011
        %2023 = vst.msk [vmem:[%s371 + $0x10] sm:$0xff] %vm2020, %v2013
        %2024 = vst.msk [vmem:[%s371 + $0x18] sm:$0xff] %vm2020, %v2015
        %s2025 = sand.u32 %s191, 1
        %s2026 = scalar_lea.sflag [#allocation4], %s2025
        %s2027 = sand.u32 %s191, 1
        %s2028 = smul.addr %s2027, 32
        %s2029 = scalar_lea.vmem [#allocation10], %s2028
        %s2030 = sand.u32 %s217, 1
        %s2031 = scalar_lea.sflag [#allocation12], %s2030
        %s2032 = sand.u32 %s217, 1
        %s2033 = smul.addr %s2032, 8
        %s2034 = scalar_lea.vmem [#allocation11], %s2033
        // Predicated region
        $region65: #{tpu_custom_call.1} parent=47 // pred_check
          %p2035 = pneg %p201
        $region66: #{tpu_custom_call.1} parent=47 // pred_check_branch
          %2037 = sbr.rel (%p2035) target = $region68
        $region67: #{tpu_custom_call.1} parent=47 // pred_region
          %s2038 = smul.u32 4, %s31
          %s2040 = ssub.s32 512, 512
          %2041 = vsyncadd %s2026, %s2040
          %s2042 = smul.addr %s2038, 128
          %s2043 = scalar_lea.hbm %s7, %s2042
          %s2044 = sshll.u32 %s2029, 4
          %s2045 = int_to_ptr.vmem [resolvable:$true] %s2044
          %2050 = dma.vmem_to_hbm [thread:$0]  %s2045, 512, %s2043, %s2026, 128, 128, 8
        $region68: #{tpu_custom_call.1} parent=47 // pred_fallthru
          _
        // Predicated region
        $region69: #{tpu_custom_call.1} parent=47 // pred_check
          %p2051 = pneg %p227
        $region70: #{tpu_custom_call.1} parent=47 // pred_check_branch
          %2053 = sbr.rel (%p2051) target = $region72
        $region71: #{tpu_custom_call.1} parent=47 // pred_region
          %s2055 = ssub.s32 128, 128
          %2056 = vsyncadd %s2031, %s2055
          %s2057 = smul.addr %s31, 128
          %s2058 = scalar_lea.hbm %s8, %s2057
          %s2060 = sshll.u32 %s2034, 4
          %s2061 = int_to_ptr.vmem [resolvable:$true] %s2060
          %2063 = dma.vmem_to_hbm [thread:$0]  %s2061, 128, %s2058, %s2031
        $region72: #{tpu_custom_call.1} parent=47 // pred_fallthru
          _
      $region48: #{tpu_custom_call.1} parent=5 // pred_fallthru
        _
      %p2064 = scmp.le.s32.totalorder 2, %s26
      // Predicated region
      $region73: #{tpu_custom_call.1} parent=5 // pred_check
        %p2065 = pneg %p2064
      $region74: #{tpu_custom_call.1} parent=5 // pred_check_branch
        %2067 = sbr.rel (%p2065) target = $region76
      $region75: #{tpu_custom_call.1} parent=5 // pred_region
        %s2068 = ssub.s32 %s26, 2
        // Predicated region
        $region77: #{tpu_custom_call.1} parent=75 // pred_check
          %p2069 = pneg %p207
        $region78: #{tpu_custom_call.1} parent=75 // pred_check_branch
          %2071 = sbr.rel (%p2069) target = $region80
        $region79: #{tpu_custom_call.1} parent=75 // pred_region
          %s2072 = sand.u32 %s192, 1
          %s2073 = scalar_lea.sflag [#allocation4], %s2072
          %s2074 = sand.u32 %s192, 1
          %s2075 = smul.addr %s2074, 32
          %s2076 = scalar_lea.vmem [#allocation10], %s2075
          %2077 = dma.done %s2073, 512
        $region80: #{tpu_custom_call.1} parent=75 // pred_fallthru
          _
        // Predicated region
        $region81: #{tpu_custom_call.1} parent=75 // pred_check
          %p2078 = pneg %p233
        $region82: #{tpu_custom_call.1} parent=75 // pred_check_branch
          %2080 = sbr.rel (%p2078) target = $region84
        $region83: #{tpu_custom_call.1} parent=75 // pred_region
          %s2081 = sand.u32 %s218, 1
          %s2082 = scalar_lea.sflag [#allocation12], %s2081
          %s2083 = sand.u32 %s218, 1
          %s2084 = smul.addr %s2083, 8
          %s2085 = scalar_lea.vmem [#allocation11], %s2084
          %2086 = dma.done %s2082, 128
        $region84: #{tpu_custom_call.1} parent=75 // pred_fallthru
          _
      $region76: #{tpu_custom_call.1} parent=5 // pred_fallthru
        _
    $region6: #{tpu_custom_call.1} parent=1 // loop_footer
      %s30 = sadd.s32 1, %s26
    $region7: #{tpu_custom_call.1} parent=1 // loop_footer_branch
      %25 = sbr.rel target = $region3
    $region8: #{tpu_custom_call.1} parent=1 // loop_exit
      _
    %2087 = vsyncpa [#allocation3], 1
    %s2088 = scalar_lea.sflag [#allocation3], 1
    %2089 = vsyncpa %s2088, 1
    %2090 = vsyncpa [#allocation6], 1
    %2091 = vsyncpa [#allocation9], 1
    %2092 = vsyncpa [#allocation4], 1
    %s2093 = scalar_lea.sflag [#allocation4], 1
    %2094 = vsyncpa %s2093, 1
    %2095 = vsyncpa [#allocation12], 1
    %s2096 = scalar_lea.sflag [#allocation12], 1
    %2097 = vsyncpa %s2096, 1

</llo_original>
